<compile_context>
chip_gen: v5e
topology: v5e:2x2
jax: 0.10.0
libtpu: 0.0.40
codegen_flags: <defaults>
</compile_context>

<pallas_src>
import math

import jax
import jax.numpy as jnp
from jax.experimental import pallas as pl
from jax.experimental.pallas import tpu as pltpu


def _round_up(x, m):
    return ((x + m - 1) // m) * m


def _choose_cout_tile(cout_total, n_batch, target_steps=8):
    """Largest Cout tile (multiple of 8, dividing cout_total) giving >= target_steps
    grid steps; falls back to the deepest achievable grid (or a single full tile)."""
    cands = [d for d in range(8, cout_total + 1, 8) if cout_total % d == 0]
    if not cands:
        return cout_total
    for d in sorted(cands, reverse=True):
        if n_batch * (cout_total // d) >= target_steps:
            return d
    return cands[0]


def pallas_lifting_conv2d(x_nchw, weight_oihw, bias_vec,
                          compute_dtype=jnp.bfloat16):
    """Valid (padding=0), stride-1, groups=1 conv2d + per-channel bias.

    Returns NCHW output (N, Cout_total, H_out, W_out) in float32, so the caller's
    (N, Cout, numH, H_out, W_out) view is a free reshape (no transpose pass).
    """
    N, Cin, H, W = x_nchw.shape
    Cout_t, Cin_w, kH, kW = weight_oihw.shape
    assert Cin_w == Cin
    H_out = H - kH + 1
    W_out = W - kW + 1
    n_taps = kH * kW
    # Matmul free dim: all H_out output rows at full input stride W. Columns
    # w in [W_out, W) are never stored (stride padding), so no post-kernel slice.
    HWo = H_out * W
    # Flattened-spatial length so every static tap slice stays in bounds; lane align.
    HW_pad = _round_up(H * W + kW - 1, 128)

    # --- wrapper prep: ONE fused cast+reshape+pad pass over x (bf16, no transpose) -
    x_flat = jnp.pad(
        x_nchw.reshape(N, Cin, H * W).astype(compute_dtype),
        ((0, 0), (0, 0), (0, HW_pad - H * W)))                    # (N, Cin, HW_pad)

    # weight -> (n_taps, Cout_total, Cin); tap index t = ky*kW + kx (tiny array)
    w_taps = jnp.transpose(weight_oihw, (2, 3, 0, 1)).reshape(n_taps, Cout_t, Cin)
    w_taps = w_taps.astype(compute_dtype)
    b_col = bias_vec.astype(jnp.float32).reshape(Cout_t, 1)

    TC = _choose_cout_tile(Cout_t, N)
    assert Cout_t % TC == 0
    n_ctiles = Cout_t // TC
    grid = (N, n_ctiles)

    def conv_kernel(x_ref, w_ref, b_ref, o_ref):
        # x_ref: (1, Cin, HW_pad) bf16   whole image n, flattened spatial (read once)
        # w_ref: (n_taps, TC, Cin) bf16  this Cout tile's weights, all taps
        # b_ref: (TC, 1)          f32
        # o_ref: (1, TC, H_out, W_out) f32
        acc = jnp.broadcast_to(b_ref[...], (TC, HWo))         # bias-initialised f32
        for t in range(n_taps):                               # static unrolled taps
            ky, kx = t // kW, t % kW
            xs = x_ref[0, :, pl.ds(ky * W + kx, HWo)]         # (Cin, HWo), static start
            acc = acc + jnp.dot(w_ref[t], xs,
                                preferred_element_type=jnp.float32)
        # Dense NCHW writeback: drop the (kW-1) stride-padding columns of each row.
        # TODO(synk): for large H_out fold this static unroll into fewer strided stores.
        for h in range(H_out):
            o_ref[0, :, h, :] = acc[:, h * W: h * W + W_out]

    cost = pl.CostEstimate(
        flops=2 * N * Cout_t * Cin * n_taps * HWo,
        transcendentals=0,
        bytes_accessed=(x_flat.size * 2 + N * w_taps.size * 2
                        + b_col.size * 4 + N * Cout_t * H_out * W_out * 4))

    out = pl.pallas_call(
        conv_kernel,
        out_shape=jax.ShapeDtypeStruct((N, Cout_t, H_out, W_out), jnp.float32),
        grid=grid,
        in_specs=[
            # x indexed by n only -> fetched once per image, reused across Cout tiles
            pl.BlockSpec((1, Cin, HW_pad), lambda n, c: (n, 0, 0)),
            pl.BlockSpec((n_taps, TC, Cin), lambda n, c: (0, c, 0)),   # weight tile
            pl.BlockSpec((TC, 1), lambda n, c: (c, 0)),                # bias tile
        ],
        out_specs=pl.BlockSpec((1, TC, H_out, W_out), lambda n, c: (n, c, 0, 0)),
        compiler_params=pltpu.CompilerParams(
            dimension_semantics=("parallel", "parallel"),
            vmem_limit_bytes=64 * 1024 * 1024),
        cost_estimate=cost,
    )(x_flat, w_taps, b_col)
    return out


# ---------------------------------------------------------------------------
# JAX port of GLiftingConvNd with a deterministic C4-rotation GroupKernel.
# ---------------------------------------------------------------------------
class GLiftingConv2dC4:
    # TODO(synk): the abstract GroupKernel (arbitrary continuous-group sampling via
    # interpolation) is not specified; a discrete C4 rot90 lifting kernel stands in.

    def __init__(self, in_channels, out_channels, kernel_size=(3, 3),
                 group_kernel_size=4, bias=True, key=jax.random.PRNGKey(0)):
        self.in_channels = in_channels
        self.out_channels = out_channels
        self.kernel_size = kernel_size
        self.group_kernel_size = group_kernel_size
        kH, kW = kernel_size
        k_w, k_b = jax.random.split(key)
        fan_in = in_channels * kH * kW
        bound = 1.0 / math.sqrt(fan_in)
        self.weight = jax.random.uniform(
            k_w, (out_channels, in_channels, kH, kW),
            minval=-bound, maxval=bound, dtype=jnp.float32)
        if bias:
            self.bias = jax.random.uniform(
                k_b, (out_channels,), minval=-bound, maxval=bound,
                dtype=jnp.float32)
        else:
            self.bias = None

    def kernel(self, H):
        # H: (num_H,) int array of C4 element indices (traceable).
        rots = jnp.stack(
            [jnp.rot90(self.weight, k=k, axes=(-2, -1)) for k in range(4)],
            axis=0)                                      # (4, Cout, Cin, kH, kW)
        w = jnp.take(rots, jnp.asarray(H) % 4, axis=0)   # (numH, Cout, Cin, kH, kW)
        return jnp.transpose(w, (1, 0, 2, 3, 4))         # (Cout, numH, Cin, kH, kW)

    def forward(self, x, H):
        N = x.shape[0]
        num_out_H = int(H.shape[0])
        kH, kW = self.kernel_size
        weight = self.kernel(H)                          # (Cout, numH, Cin, kH, kW)
        w_flat = weight.reshape(self.out_channels * num_out_H,
                                self.in_channels, kH, kW)
        if self.bias is not None:
            # bias per out_channel broadcast over group axis -> flat channel o*numH+h
            bias_full = jnp.repeat(self.bias, num_out_H)
        else:
            bias_full = jnp.zeros((self.out_channels * num_out_H,), jnp.float32)

        # (N, Cout*numH, H_out, W_out) NCHW directly from the kernel.
        y = pallas_lifting_conv2d(x, w_flat, bias_full)
        # Free view (flat channel order is o*numH + h) — no transpose / slice passes.
        y = y.reshape(N, self.out_channels, num_out_H, y.shape[-2], y.shape[-1])
        return y, H


if __name__ == "__main__":
    key = jax.random.PRNGKey(0)
    k_x, k_m = jax.random.split(key)

    N, Cin, Hs, Ws = 2, 4, 16, 16
    Cout, kH, kW = 8, 3, 3
    num_H = 4  # |C4|

    x = jax.random.normal(k_x, (N, Cin, Hs, Ws), dtype=jnp.float32)
    Hgrp = jnp.arange(num_H, dtype=jnp.int32)  # C4 group elements

    module = GLiftingConv2dC4(Cin, Cout, (kH, kW), group_kernel_size=num_H,
                              bias=True, key=k_m)

    out, H_ret = module.forward(x, Hgrp)
    out = jax.block_until_ready(out)

    # Reference: f32 XLA conv on the same bf16-quantized operands (the Pallas kernel
    # feeds the MXU in bf16 with an f32 accumulator), f32 bias add.
    weight = module.kernel(Hgrp).reshape(Cout * num_H, Cin, kH, kW)
    x_q = x.astype(jnp.bfloat16).astype(jnp.float32)
    w_q = weight.astype(jnp.bfloat16).astype(jnp.float32)
    ref = jax.lax.conv_general_dilated(
        x_q, w_q, window_strides=(1, 1), padding="VALID",
        dimension_numbers=("NCHW", "OIHW", "NCHW"),
        precision=jax.lax.Precision.HIGHEST)
    ref = ref.reshape(N, Cout, num_H, ref.shape[-2], ref.shape[-1])
    ref = ref + module.bias.reshape(Cout, 1, 1, 1)

    assert out.shape == (N, Cout, num_H, Hs - kH + 1, Ws - kW + 1), out.shape
    err = float(jnp.max(jnp.abs(out - ref)))
    assert err < 2e-3, err

    print("KERNEL_OK")
</pallas_src>

<mosaic_0001>
module attributes {stable_mosaic.version = 11 : i64} {
  func.func @conv_kernel(%arg0: i32, %arg1: i32, %arg2: memref<1x4x384xbf16, #tpu.memory_space<vmem>>, %arg3: memref<9x8x4xbf16, #tpu.memory_space<vmem>>, %arg4: memref<8x1xf32, #tpu.memory_space<vmem>>, %arg5: memref<1x8x14x14xf32, #tpu.memory_space<vmem>>) attributes {dimension_semantics = [#tpu.dimension_semantics<parallel>, #tpu.dimension_semantics<parallel>], iteration_bounds = array<i64: 2, 4>, scalar_prefetch = 0 : i64, scratch_operands = 0 : i64, tpu.core_type = #tpu.core_type<tc>, window_params = [{transform_indices = @transform_0, window_bounds = array<i64: 1, 4, 384>}, {transform_indices = @transform_1, window_bounds = array<i64: 9, 8, 4>}, {transform_indices = @transform_2, window_bounds = array<i64: 8, 1>}, {transform_indices = @transform_3, window_bounds = array<i64: 1, 8, 14, 14>}]} {
    %c0 = arith.constant 0 : index
    %c0_0 = arith.constant 0 : index
    %0 = vector.load %arg4[%c0, %c0_0] : memref<8x1xf32, #tpu.memory_space<vmem>>, vector<8x1xf32>
    %1 = vector.shape_cast %0 : vector<8x1xf32> to vector<8x1xf32>
    %2 = vector.broadcast %1 : vector<8x1xf32> to vector<8x224xf32>
    %c0_1 = arith.constant 0 : index
    %c0_2 = arith.constant 0 : index
    %c0_3 = arith.constant 0 : index
    %3 = vector.load %arg2[%c0_1, %c0_2, %c0_3] : memref<1x4x384xbf16, #tpu.memory_space<vmem>>, vector<1x4x224xbf16>
    %4 = vector.shape_cast %3 : vector<1x4x224xbf16> to vector<4x224xbf16>
    %c0_4 = arith.constant 0 : index
    %c0_5 = arith.constant 0 : index
    %c0_6 = arith.constant 0 : index
    %5 = vector.load %arg3[%c0_4, %c0_5, %c0_6] : memref<9x8x4xbf16, #tpu.memory_space<vmem>>, vector<1x8x4xbf16>
    %6 = vector.shape_cast %5 : vector<1x8x4xbf16> to vector<8x4xbf16>
    %cst = arith.constant dense<0.000000e+00> : vector<8x224xf32>
    %7 = tpu.matmul %6, %4, %cst {dimension_numbers = #tpu.dot_dimension_numbers<[1], [0], [0], [1], [0, 0, 1, 1], [], []>} : vector<8x4xbf16>, vector<4x224xbf16>, vector<8x224xf32> -> vector<8x224xf32>
    %8 = arith.addf %2, %7 : vector<8x224xf32>
    %c0_7 = arith.constant 0 : index
    %c0_8 = arith.constant 0 : index
    %c1 = arith.constant 1 : index
    %9 = vector.load %arg2[%c0_7, %c0_8, %c1] : memref<1x4x384xbf16, #tpu.memory_space<vmem>>, vector<1x4x224xbf16>
    %10 = vector.shape_cast %9 : vector<1x4x224xbf16> to vector<4x224xbf16>
    %c1_9 = arith.constant 1 : index
    %c0_10 = arith.constant 0 : index
    %c0_11 = arith.constant 0 : index
    %11 = vector.load %arg3[%c1_9, %c0_10, %c0_11] : memref<9x8x4xbf16, #tpu.memory_space<vmem>>, vector<1x8x4xbf16>
    %12 = vector.shape_cast %11 : vector<1x8x4xbf16> to vector<8x4xbf16>
    %cst_12 = arith.constant dense<0.000000e+00> : vector<8x224xf32>
    %13 = tpu.matmul %12, %10, %cst_12 {dimension_numbers = #tpu.dot_dimension_numbers<[1], [0], [0], [1], [0, 0, 1, 1], [], []>} : vector<8x4xbf16>, vector<4x224xbf16>, vector<8x224xf32> -> vector<8x224xf32>
    %14 = arith.addf %8, %13 : vector<8x224xf32>
    %c0_13 = arith.constant 0 : index
    %c0_14 = arith.constant 0 : index
    %c2 = arith.constant 2 : index
    %15 = vector.load %arg2[%c0_13, %c0_14, %c2] : memref<1x4x384xbf16, #tpu.memory_space<vmem>>, vector<1x4x224xbf16>
    %16 = vector.shape_cast %15 : vector<1x4x224xbf16> to vector<4x224xbf16>
    %c2_15 = arith.constant 2 : index
    %c0_16 = arith.constant 0 : index
    %c0_17 = arith.constant 0 : index
    %17 = vector.load %arg3[%c2_15, %c0_16, %c0_17] : memref<9x8x4xbf16, #tpu.memory_space<vmem>>, vector<1x8x4xbf16>
    %18 = vector.shape_cast %17 : vector<1x8x4xbf16> to vector<8x4xbf16>
    %cst_18 = arith.constant dense<0.000000e+00> : vector<8x224xf32>
    %19 = tpu.matmul %18, %16, %cst_18 {dimension_numbers = #tpu.dot_dimension_numbers<[1], [0], [0], [1], [0, 0, 1, 1], [], []>} : vector<8x4xbf16>, vector<4x224xbf16>, vector<8x224xf32> -> vector<8x224xf32>
    %20 = arith.addf %14, %19 : vector<8x224xf32>
    %c0_19 = arith.constant 0 : index
    %c0_20 = arith.constant 0 : index
    %c16 = arith.constant 16 : index
    %21 = vector.load %arg2[%c0_19, %c0_20, %c16] : memref<1x4x384xbf16, #tpu.memory_space<vmem>>, vector<1x4x224xbf16>
    %22 = vector.shape_cast %21 : vector<1x4x224xbf16> to vector<4x224xbf16>
    %c3 = arith.constant 3 : index
    %c0_21 = arith.constant 0 : index
    %c0_22 = arith.constant 0 : index
    %23 = vector.load %arg3[%c3, %c0_21, %c0_22] : memref<9x8x4xbf16, #tpu.memory_space<vmem>>, vector<1x8x4xbf16>
    %24 = vector.shape_cast %23 : vector<1x8x4xbf16> to vector<8x4xbf16>
    %cst_23 = arith.constant dense<0.000000e+00> : vector<8x224xf32>
    %25 = tpu.matmul %24, %22, %cst_23 {dimension_numbers = #tpu.dot_dimension_numbers<[1], [0], [0], [1], [0, 0, 1, 1], [], []>} : vector<8x4xbf16>, vector<4x224xbf16>, vector<8x224xf32> -> vector<8x224xf32>
    %26 = arith.addf %20, %25 : vector<8x224xf32>
    %c0_24 = arith.constant 0 : index
    %c0_25 = arith.constant 0 : index
    %c17 = arith.constant 17 : index
    %27 = vector.load %arg2[%c0_24, %c0_25, %c17] : memref<1x4x384xbf16, #tpu.memory_space<vmem>>, vector<1x4x224xbf16>
    %28 = vector.shape_cast %27 : vector<1x4x224xbf16> to vector<4x224xbf16>
    %c4 = arith.constant 4 : index
    %c0_26 = arith.constant 0 : index
    %c0_27 = arith.constant 0 : index
    %29 = vector.load %arg3[%c4, %c0_26, %c0_27] : memref<9x8x4xbf16, #tpu.memory_space<vmem>>, vector<1x8x4xbf16>
    %30 = vector.shape_cast %29 : vector<1x8x4xbf16> to vector<8x4xbf16>
    %cst_28 = arith.constant dense<0.000000e+00> : vector<8x224xf32>
    %31 = tpu.matmul %30, %28, %cst_28 {dimension_numbers = #tpu.dot_dimension_numbers<[1], [0], [0], [1], [0, 0, 1, 1], [], []>} : vector<8x4xbf16>, vector<4x224xbf16>, vector<8x224xf32> -> vector<8x224xf32>
    %32 = arith.addf %26, %31 : vector<8x224xf32>
    %c0_29 = arith.constant 0 : index
    %c0_30 = arith.constant 0 : index
    %c18 = arith.constant 18 : index
    %33 = vector.load %arg2[%c0_29, %c0_30, %c18] : memref<1x4x384xbf16, #tpu.memory_space<vmem>>, vector<1x4x224xbf16>
    %34 = vector.shape_cast %33 : vector<1x4x224xbf16> to vector<4x224xbf16>
    %c5 = arith.constant 5 : index
    %c0_31 = arith.constant 0 : index
    %c0_32 = arith.constant 0 : index
    %35 = vector.load %arg3[%c5, %c0_31, %c0_32] : memref<9x8x4xbf16, #tpu.memory_space<vmem>>, vector<1x8x4xbf16>
    %36 = vector.shape_cast %35 : vector<1x8x4xbf16> to vector<8x4xbf16>
    %cst_33 = arith.constant dense<0.000000e+00> : vector<8x224xf32>
    %37 = tpu.matmul %36, %34, %cst_33 {dimension_numbers = #tpu.dot_dimension_numbers<[1], [0], [0], [1], [0, 0, 1, 1], [], []>} : vector<8x4xbf16>, vector<4x224xbf16>, vector<8x224xf32> -> vector<8x224xf32>
    %38 = arith.addf %32, %37 : vector<8x224xf32>
    %c0_34 = arith.constant 0 : index
    %c0_35 = arith.constant 0 : index
    %c32 = arith.constant 32 : index
    %39 = vector.load %arg2[%c0_34, %c0_35, %c32] : memref<1x4x384xbf16, #tpu.memory_space<vmem>>, vector<1x4x224xbf16>
    %40 = vector.shape_cast %39 : vector<1x4x224xbf16> to vector<4x224xbf16>
    %c6 = arith.constant 6 : index
    %c0_36 = arith.constant 0 : index
    %c0_37 = arith.constant 0 : index
    %41 = vector.load %arg3[%c6, %c0_36, %c0_37] : memref<9x8x4xbf16, #tpu.memory_space<vmem>>, vector<1x8x4xbf16>
    %42 = vector.shape_cast %41 : vector<1x8x4xbf16> to vector<8x4xbf16>
    %cst_38 = arith.constant dense<0.000000e+00> : vector<8x224xf32>
    %43 = tpu.matmul %42, %40, %cst_38 {dimension_numbers = #tpu.dot_dimension_numbers<[1], [0], [0], [1], [0, 0, 1, 1], [], []>} : vector<8x4xbf16>, vector<4x224xbf16>, vector<8x224xf32> -> vector<8x224xf32>
    %44 = arith.addf %38, %43 : vector<8x224xf32>
    %c0_39 = arith.constant 0 : index
    %c0_40 = arith.constant 0 : index
    %c33 = arith.constant 33 : index
    %45 = vector.load %arg2[%c0_39, %c0_40, %c33] : memref<1x4x384xbf16, #tpu.memory_space<vmem>>, vector<1x4x224xbf16>
    %46 = vector.shape_cast %45 : vector<1x4x224xbf16> to vector<4x224xbf16>
    %c7 = arith.constant 7 : index
    %c0_41 = arith.constant 0 : index
    %c0_42 = arith.constant 0 : index
    %47 = vector.load %arg3[%c7, %c0_41, %c0_42] : memref<9x8x4xbf16, #tpu.memory_space<vmem>>, vector<1x8x4xbf16>
    %48 = vector.shape_cast %47 : vector<1x8x4xbf16> to vector<8x4xbf16>
    %cst_43 = arith.constant dense<0.000000e+00> : vector<8x224xf32>
    %49 = tpu.matmul %48, %46, %cst_43 {dimension_numbers = #tpu.dot_dimension_numbers<[1], [0], [0], [1], [0, 0, 1, 1], [], []>} : vector<8x4xbf16>, vector<4x224xbf16>, vector<8x224xf32> -> vector<8x224xf32>
    %50 = arith.addf %44, %49 : vector<8x224xf32>
    %c0_44 = arith.constant 0 : index
    %c0_45 = arith.constant 0 : index
    %c34 = arith.constant 34 : index
    %51 = vector.load %arg2[%c0_44, %c0_45, %c34] : memref<1x4x384xbf16, #tpu.memory_space<vmem>>, vector<1x4x224xbf16>
    %52 = vector.shape_cast %51 : vector<1x4x224xbf16> to vector<4x224xbf16>
    %c8 = arith.constant 8 : index
    %c0_46 = arith.constant 0 : index
    %c0_47 = arith.constant 0 : index
    %53 = vector.load %arg3[%c8, %c0_46, %c0_47] : memref<9x8x4xbf16, #tpu.memory_space<vmem>>, vector<1x8x4xbf16>
    %54 = vector.shape_cast %53 : vector<1x8x4xbf16> to vector<8x4xbf16>
    %cst_48 = arith.constant dense<0.000000e+00> : vector<8x224xf32>
    %55 = tpu.matmul %54, %52, %cst_48 {dimension_numbers = #tpu.dot_dimension_numbers<[1], [0], [0], [1], [0, 0, 1, 1], [], []>} : vector<8x4xbf16>, vector<4x224xbf16>, vector<8x224xf32> -> vector<8x224xf32>
    %56 = arith.addf %50, %55 : vector<8x224xf32>
    %57 = vector.extract_strided_slice %56 {offsets = [0, 0], sizes = [8, 14], strides = [1, 1]} : vector<8x224xf32> to vector<8x14xf32>
    %c0_49 = arith.constant 0 : index
    %c0_50 = arith.constant 0 : index
    %c0_51 = arith.constant 0 : index
    %c0_52 = arith.constant 0 : index
    %58 = vector.load %arg5[%c0_49, %c0_50, %c0_51, %c0_52] : memref<1x8x14x14xf32, #tpu.memory_space<vmem>>, vector<1x8x1x14xf32>
    %59 = vector.shape_cast %58 : vector<1x8x1x14xf32> to vector<8x14xf32>
    %60 = vector.shape_cast %57 : vector<8x14xf32> to vector<1x8x1x14xf32>
    tpu.vector_store %arg5[%c0_49, %c0_50, %c0_51, %c0_52], %60 {strides = array<i32>} : memref<1x8x14x14xf32, #tpu.memory_space<vmem>>, vector<1x8x1x14xf32>,
    %61 = vector.extract_strided_slice %56 {offsets = [0, 16], sizes = [8, 14], strides = [1, 1]} : vector<8x224xf32> to vector<8x14xf32>
    %c0_53 = arith.constant 0 : index
    %c0_54 = arith.constant 0 : index
    %c1_55 = arith.constant 1 : index
    %c0_56 = arith.constant 0 : index
    %62 = vector.load %arg5[%c0_53, %c0_54, %c1_55, %c0_56] : memref<1x8x14x14xf32, #tpu.memory_space<vmem>>, vector<1x8x1x14xf32>
    %63 = vector.shape_cast %62 : vector<1x8x1x14xf32> to vector<8x14xf32>
    %64 = vector.shape_cast %61 : vector<8x14xf32> to vector<1x8x1x14xf32>
    tpu.vector_store %arg5[%c0_53, %c0_54, %c1_55, %c0_56], %64 {strides = array<i32>} : memref<1x8x14x14xf32, #tpu.memory_space<vmem>>, vector<1x8x1x14xf32>,
    %65 = vector.extract_strided_slice %56 {offsets = [0, 32], sizes = [8, 14], strides = [1, 1]} : vector<8x224xf32> to vector<8x14xf32>
    %c0_57 = arith.constant 0 : index
    %c0_58 = arith.constant 0 : index
    %c2_59 = arith.constant 2 : index
    %c0_60 = arith.constant 0 : index
    %66 = vector.load %arg5[%c0_57, %c0_58, %c2_59, %c0_60] : memref<1x8x14x14xf32, #tpu.memory_space<vmem>>, vector<1x8x1x14xf32>
    %67 = vector.shape_cast %66 : vector<1x8x1x14xf32> to vector<8x14xf32>
    %68 = vector.shape_cast %65 : vector<8x14xf32> to vector<1x8x1x14xf32>
    tpu.vector_store %arg5[%c0_57, %c0_58, %c2_59, %c0_60], %68 {strides = array<i32>} : memref<1x8x14x14xf32, #tpu.memory_space<vmem>>, vector<1x8x1x14xf32>,
    %69 = vector.extract_strided_slice %56 {offsets = [0, 48], sizes = [8, 14], strides = [1, 1]} : vector<8x224xf32> to vector<8x14xf32>
    %c0_61 = arith.constant 0 : index
    %c0_62 = arith.constant 0 : index
    %c3_63 = arith.constant 3 : index
    %c0_64 = arith.constant 0 : index
    %70 = vector.load %arg5[%c0_61, %c0_62, %c3_63, %c0_64] : memref<1x8x14x14xf32, #tpu.memory_space<vmem>>, vector<1x8x1x14xf32>
    %71 = vector.shape_cast %70 : vector<1x8x1x14xf32> to vector<8x14xf32>
    %72 = vector.shape_cast %69 : vector<8x14xf32> to vector<1x8x1x14xf32>
    tpu.vector_store %arg5[%c0_61, %c0_62, %c3_63, %c0_64], %72 {strides = array<i32>} : memref<1x8x14x14xf32, #tpu.memory_space<vmem>>, vector<1x8x1x14xf32>,
    %73 = vector.extract_strided_slice %56 {offsets = [0, 64], sizes = [8, 14], strides = [1, 1]} : vector<8x224xf32> to vector<8x14xf32>
    %c0_65 = arith.constant 0 : index
    %c0_66 = arith.constant 0 : index
    %c4_67 = arith.constant 4 : index
    %c0_68 = arith.constant 0 : index
    %74 = vector.load %arg5[%c0_65, %c0_66, %c4_67, %c0_68] : memref<1x8x14x14xf32, #tpu.memory_space<vmem>>, vector<1x8x1x14xf32>
    %75 = vector.shape_cast %74 : vector<1x8x1x14xf32> to vector<8x14xf32>
    %76 = vector.shape_cast %73 : vector<8x14xf32> to vector<1x8x1x14xf32>
    tpu.vector_store %arg5[%c0_65, %c0_66, %c4_67, %c0_68], %76 {strides = array<i32>} : memref<1x8x14x14xf32, #tpu.memory_space<vmem>>, vector<1x8x1x14xf32>,
    %77 = vector.extract_strided_slice %56 {offsets = [0, 80], sizes = [8, 14], strides = [1, 1]} : vector<8x224xf32> to vector<8x14xf32>
    %c0_69 = arith.constant 0 : index
    %c0_70 = arith.constant 0 : index
    %c5_71 = arith.constant 5 : index
    %c0_72 = arith.constant 0 : index
    %78 = vector.load %arg5[%c0_69, %c0_70, %c5_71, %c0_72] : memref<1x8x14x14xf32, #tpu.memory_space<vmem>>, vector<1x8x1x14xf32>
    %79 = vector.shape_cast %78 : vector<1x8x1x14xf32> to vector<8x14xf32>
    %80 = vector.shape_cast %77 : vector<8x14xf32> to vector<1x8x1x14xf32>
    tpu.vector_store %arg5[%c0_69, %c0_70, %c5_71, %c0_72], %80 {strides = array<i32>} : memref<1x8x14x14xf32, #tpu.memory_space<vmem>>, vector<1x8x1x14xf32>,
    %81 = vector.extract_strided_slice %56 {offsets = [0, 96], sizes = [8, 14], strides = [1, 1]} : vector<8x224xf32> to vector<8x14xf32>
    %c0_73 = arith.constant 0 : index
    %c0_74 = arith.constant 0 : index
    %c6_75 = arith.constant 6 : index
    %c0_76 = arith.constant 0 : index
    %82 = vector.load %arg5[%c0_73, %c0_74, %c6_75, %c0_76] : memref<1x8x14x14xf32, #tpu.memory_space<vmem>>, vector<1x8x1x14xf32>
    %83 = vector.shape_cast %82 : vector<1x8x1x14xf32> to vector<8x14xf32>
    %84 = vector.shape_cast %81 : vector<8x14xf32> to vector<1x8x1x14xf32>
    tpu.vector_store %arg5[%c0_73, %c0_74, %c6_75, %c0_76], %84 {strides = array<i32>} : memref<1x8x14x14xf32, #tpu.memory_space<vmem>>, vector<1x8x1x14xf32>,
    %85 = vector.extract_strided_slice %56 {offsets = [0, 112], sizes = [8, 14], strides = [1, 1]} : vector<8x224xf32> to vector<8x14xf32>
    %c0_77 = arith.constant 0 : index
    %c0_78 = arith.constant 0 : index
    %c7_79 = arith.constant 7 : index
    %c0_80 = arith.constant 0 : index
    %86 = vector.load %arg5[%c0_77, %c0_78, %c7_79, %c0_80] : memref<1x8x14x14xf32, #tpu.memory_space<vmem>>, vector<1x8x1x14xf32>
    %87 = vector.shape_cast %86 : vector<1x8x1x14xf32> to vector<8x14xf32>
    %88 = vector.shape_cast %85 : vector<8x14xf32> to vector<1x8x1x14xf32>
    tpu.vector_store %arg5[%c0_77, %c0_78, %c7_79, %c0_80], %88 {strides = array<i32>} : memref<1x8x14x14xf32, #tpu.memory_space<vmem>>, vector<1x8x1x14xf32>,
    %89 = vector.extract_strided_slice %56 {offsets = [0, 128], sizes = [8, 14], strides = [1, 1]} : vector<8x224xf32> to vector<8x14xf32>
    %c0_81 = arith.constant 0 : index
    %c0_82 = arith.constant 0 : index
    %c8_83 = arith.constant 8 : index
    %c0_84 = arith.constant 0 : index
    %90 = vector.load %arg5[%c0_81, %c0_82, %c8_83, %c0_84] : memref<1x8x14x14xf32, #tpu.memory_space<vmem>>, vector<1x8x1x14xf32>
    %91 = vector.shape_cast %90 : vector<1x8x1x14xf32> to vector<8x14xf32>
    %92 = vector.shape_cast %89 : vector<8x14xf32> to vector<1x8x1x14xf32>
    tpu.vector_store %arg5[%c0_81, %c0_82, %c8_83, %c0_84], %92 {strides = array<i32>} : memref<1x8x14x14xf32, #tpu.memory_space<vmem>>, vector<1x8x1x14xf32>,
    %93 = vector.extract_strided_slice %56 {offsets = [0, 144], sizes = [8, 14], strides = [1, 1]} : vector<8x224xf32> to vector<8x14xf32>
    %c0_85 = arith.constant 0 : index
    %c0_86 = arith.constant 0 : index
    %c9 = arith.constant 9 : index
    %c0_87 = arith.constant 0 : index
    %94 = vector.load %arg5[%c0_85, %c0_86, %c9, %c0_87] : memref<1x8x14x14xf32, #tpu.memory_space<vmem>>, vector<1x8x1x14xf32>
    %95 = vector.shape_cast %94 : vector<1x8x1x14xf32> to vector<8x14xf32>
    %96 = vector.shape_cast %93 : vector<8x14xf32> to vector<1x8x1x14xf32>
    tpu.vector_store %arg5[%c0_85, %c0_86, %c9, %c0_87], %96 {strides = array<i32>} : memref<1x8x14x14xf32, #tpu.memory_space<vmem>>, vector<1x8x1x14xf32>,
    %97 = vector.extract_strided_slice %56 {offsets = [0, 160], sizes = [8, 14], strides = [1, 1]} : vector<8x224xf32> to vector<8x14xf32>
    %c0_88 = arith.constant 0 : index
    %c0_89 = arith.constant 0 : index
    %c10 = arith.constant 10 : index
    %c0_90 = arith.constant 0 : index
    %98 = vector.load %arg5[%c0_88, %c0_89, %c10, %c0_90] : memref<1x8x14x14xf32, #tpu.memory_space<vmem>>, vector<1x8x1x14xf32>
    %99 = vector.shape_cast %98 : vector<1x8x1x14xf32> to vector<8x14xf32>
    %100 = vector.shape_cast %97 : vector<8x14xf32> to vector<1x8x1x14xf32>
    tpu.vector_store %arg5[%c0_88, %c0_89, %c10, %c0_90], %100 {strides = array<i32>} : memref<1x8x14x14xf32, #tpu.memory_space<vmem>>, vector<1x8x1x14xf32>,
    %101 = vector.extract_strided_slice %56 {offsets = [0, 176], sizes = [8, 14], strides = [1, 1]} : vector<8x224xf32> to vector<8x14xf32>
    %c0_91 = arith.constant 0 : index
    %c0_92 = arith.constant 0 : index
    %c11 = arith.constant 11 : index
    %c0_93 = arith.constant 0 : index
    %102 = vector.load %arg5[%c0_91, %c0_92, %c11, %c0_93] : memref<1x8x14x14xf32, #tpu.memory_space<vmem>>, vector<1x8x1x14xf32>
    %103 = vector.shape_cast %102 : vector<1x8x1x14xf32> to vector<8x14xf32>
    %104 = vector.shape_cast %101 : vector<8x14xf32> to vector<1x8x1x14xf32>
    tpu.vector_store %arg5[%c0_91, %c0_92, %c11, %c0_93], %104 {strides = array<i32>} : memref<1x8x14x14xf32, #tpu.memory_space<vmem>>, vector<1x8x1x14xf32>,
    %105 = vector.extract_strided_slice %56 {offsets = [0, 192], sizes = [8, 14], strides = [1, 1]} : vector<8x224xf32> to vector<8x14xf32>
    %c0_94 = arith.constant 0 : index
    %c0_95 = arith.constant 0 : index
    %c12 = arith.constant 12 : index
    %c0_96 = arith.constant 0 : index
    %106 = vector.load %arg5[%c0_94, %c0_95, %c12, %c0_96] : memref<1x8x14x14xf32, #tpu.memory_space<vmem>>, vector<1x8x1x14xf32>
    %107 = vector.shape_cast %106 : vector<1x8x1x14xf32> to vector<8x14xf32>
    %108 = vector.shape_cast %105 : vector<8x14xf32> to vector<1x8x1x14xf32>
    tpu.vector_store %arg5[%c0_94, %c0_95, %c12, %c0_96], %108 {strides = array<i32>} : memref<1x8x14x14xf32, #tpu.memory_space<vmem>>, vector<1x8x1x14xf32>,
    %109 = vector.extract_strided_slice %56 {offsets = [0, 208], sizes = [8, 14], strides = [1, 1]} : vector<8x224xf32> to vector<8x14xf32>
    %c0_97 = arith.constant 0 : index
    %c0_98 = arith.constant 0 : index
    %c13 = arith.constant 13 : index
    %c0_99 = arith.constant 0 : index
    %110 = vector.load %arg5[%c0_97, %c0_98, %c13, %c0_99] : memref<1x8x14x14xf32, #tpu.memory_space<vmem>>, vector<1x8x1x14xf32>
    %111 = vector.shape_cast %110 : vector<1x8x1x14xf32> to vector<8x14xf32>
    %112 = vector.shape_cast %109 : vector<8x14xf32> to vector<1x8x1x14xf32>
    tpu.vector_store %arg5[%c0_97, %c0_98, %c13, %c0_99], %112 {strides = array<i32>} : memref<1x8x14x14xf32, #tpu.memory_space<vmem>>, vector<1x8x1x14xf32>,
    return
  }
  func.func @transform_0(%arg0: i32, %arg1: i32) -> (i32, i32, i32) {
    %c0_i32 = arith.constant 0 : i32
    %c0_i32_0 = arith.constant 0 : i32
    %c0_i32_1 = arith.constant 0 : i32
    return %arg0, %c0_i32, %c0_i32_0 : i32, i32, i32
  }
  func.func @transform_1(%arg0: i32, %arg1: i32) -> (i32, i32, i32) {
    %c0_i32 = arith.constant 0 : i32
    %c0_i32_0 = arith.constant 0 : i32
    %c0_i32_1 = arith.constant 0 : i32
    return %c0_i32, %arg1, %c0_i32_0 : i32, i32, i32
  }
  func.func @transform_2(%arg0: i32, %arg1: i32) -> (i32, i32) {
    %c0_i32 = arith.constant 0 : i32
    %c0_i32_0 = arith.constant 0 : i32
    return %arg1, %c0_i32 : i32, i32
  }
  func.func @transform_3(%arg0: i32, %arg1: i32) -> (i32, i32, i32, i32) {
    %c0_i32 = arith.constant 0 : i32
    %c0_i32_0 = arith.constant 0 : i32
    %c0_i32_1 = arith.constant 0 : i32
    return %arg0, %arg1, %c0_i32, %c0_i32_0 : i32, i32, i32, i32
  }
}

</mosaic_0001>

<llo_original>
// kernel: tpu_custom_call.1
$region0: #{tpu_custom_call.1}
  #allocation0 [shape = 'u32[]', space=smem, size = 0x4, offset = 0x4, fixed_abs, tag = 'smem constant byte address 0x4 - core index']
  #allocation1 [shape = 'u32[72,128]{1,0:T(1,128)}', space=vmem, size = 0x9000, scoped, tag = 'internal scratch']
  %s0 = inlined_call_operand.vmem [shape: bf16[2,4,384], index: 0, kind: input, shape index: {}]
  %s1 = inlined_call_operand.vmem [shape: bf16[9,32,4], index: 1, kind: input, shape index: {}]
  %s2 = inlined_call_operand.vmem [shape: f32[32,1], index: 2, kind: input, shape index: {}]
  %s3 = inlined_call_operand.vmem [shape: f32[2,32,14,14], index: 3, kind: output, shape index: {}]
  %s4 = sld [smem:[#allocation0]]
  $region86: #{tpu_custom_call.1} parent=0
    _
  %s6 = ssub.s32 1, %s4
  %s7 = scalar_select 0, %s6, %s4
  $region1: #{tpu_custom_call.1} parent=0
    #allocation2 [shape = 'u8[36864]{0}', space=vmem, size = 0x9000, scoped, tag = 'input window, operand 1']
    loop: start=0, step=1, limit=10
    $region2: #{tpu_custom_call.1} parent=1 // loop_pre_header
      _
    $region3: #{tpu_custom_call.1} parent=1 // loop_header
      %s9 = sphi 0, %s13
      %p10 = scmp.ge.s32.totalorder %s9, 10
      %s16 = sphi 0, %s28
      %s17 = sphi 0, %s24
      %s18 = sphi 0, %s16
      %s19 = sphi 0, %s17
      %s20 = sphi 0, %s18
      %s21 = sphi 0, %s19
      %s31 = sphi 0, %s33
      %s34 = sphi 0, %s31
      %s35 = sphi 0, %s34
      %s51 = sphi 0, %s35
      %s57 = sphi 0, %s59
      %s60 = sphi 0, %s57
      %s61 = sphi 0, %s60
      %s77 = sphi 0, %s61
      %s83 = sphi 0, %s85
      %s86 = sphi 0, %s83
      %s87 = sphi 0, %s86
      %s103 = sphi 0, %s87
      %s111 = sphi 0, %s113
      %s114 = sphi 0, %s111
      %s115 = sphi 0, %s114
      %s131 = sphi 0, %s115
    $region4: #{tpu_custom_call.1} parent=1 // loop_header_branch
      %12 = sbr.rel (%p10) target = $region8
    $region5: #{tpu_custom_call.1} parent=1 // loop_body
      %s14 = ssub.s32 %s9, 1
      %s15 = ssub.s32 %s9, 2
      %s22 = sadd.s32 1, %s17
      %p23 = scmp.ge.s32.totalorder %s22, 4
      %s24 = scalar_select %p23, 0, %s22
      %s25 = sadd.s32 1, %s16
      %s26 = scalar_select %p23, %s25, %s16
      %p27 = scmp.ge.s32.totalorder %s26, 2
      %s28 = scalar_select %p27, 0, %s26
      %s29 = ssub.s32 %s16, %s28
      %p30 = scmp.eq.s32.totalorder %s29, 0
      %s32 = sadd.s32 %s31, 1
      %s33 = scalar_select %p30, %s31, %s32
      %p36 = pneg %p30
      %p37 = scmp.eq.s32.totalorder %s9, 7
      %p38 = por %p36, %p37
      %p39 = scmp.ne.s32.totalorder %s31, %s34
      %p40 = scmp.eq.s32.totalorder %s9, 0
      %p41 = por %p39, %p40
      %p42 = scmp.ne.s32.totalorder %s31, %s34
      %p43 = scmp.eq.s32.totalorder %s14, 7
      %p44 = por %p42, %p43
      %p45 = scmp.ne.s32.totalorder %s34, %s35
      %p46 = scmp.eq.s32.totalorder %s14, 0
      %p47 = por %p45, %p46
      %p48 = scmp.ne.s32.totalorder %s34, %s35
      %p49 = scmp.eq.s32.totalorder %s15, 7
      %p50 = por %p48, %p49
      %p52 = scmp.ne.s32.totalorder %s35, %s51
      %p53 = scmp.eq.s32.totalorder %s15, 0
      %p54 = por %p52, %p53
      %s55 = ssub.s32 %s17, %s24
      %p56 = scmp.eq.s32.totalorder %s55, 0
      %s58 = sadd.s32 %s57, 1
      %s59 = scalar_select %p56, %s57, %s58
      %p62 = pneg %p56
      %p63 = scmp.eq.s32.totalorder %s9, 7
      %p64 = por %p62, %p63
      %p65 = scmp.ne.s32.totalorder %s57, %s60
      %p66 = scmp.eq.s32.totalorder %s9, 0
      %p67 = por %p65, %p66
      %p68 = scmp.ne.s32.totalorder %s57, %s60
      %p69 = scmp.eq.s32.totalorder %s14, 7
      %p70 = por %p68, %p69
      %p71 = scmp.ne.s32.totalorder %s60, %s61
      %p72 = scmp.eq.s32.totalorder %s14, 0
      %p73 = por %p71, %p72
      %p74 = scmp.ne.s32.totalorder %s60, %s61
      %p75 = scmp.eq.s32.totalorder %s15, 7
      %p76 = por %p74, %p75
      %p78 = scmp.ne.s32.totalorder %s61, %s77
      %p79 = scmp.eq.s32.totalorder %s15, 0
      %p80 = por %p78, %p79
      %s81 = ssub.s32 %s17, %s24
      %p82 = scmp.eq.s32.totalorder %s81, 0
      %s84 = sadd.s32 %s83, 1
      %s85 = scalar_select %p82, %s83, %s84
      %p88 = pneg %p82
      %p89 = scmp.eq.s32.totalorder %s9, 7
      %p90 = por %p88, %p89
      %p91 = scmp.ne.s32.totalorder %s83, %s86
      %p92 = scmp.eq.s32.totalorder %s9, 0
      %p93 = por %p91, %p92
      %p94 = scmp.ne.s32.totalorder %s83, %s86
      %p95 = scmp.eq.s32.totalorder %s14, 7
      %p96 = por %p94, %p95
      %p97 = scmp.ne.s32.totalorder %s86, %s87
      %p98 = scmp.eq.s32.totalorder %s14, 0
      %p99 = por %p97, %p98
      %p100 = scmp.ne.s32.totalorder %s86, %s87
      %p101 = scmp.eq.s32.totalorder %s15, 7
      %p102 = por %p100, %p101
      %p104 = scmp.ne.s32.totalorder %s87, %s103
      %p105 = scmp.eq.s32.totalorder %s15, 0
      %p106 = por %p104, %p105
      %s107 = ssub.s32 %s16, %s28
      %s108 = ssub.s32 %s17, %s24
      %s109 = sor.u32 %s107, %s108
      %p110 = scmp.eq.s32.totalorder %s109, 0
      %s112 = sadd.s32 %s111, 1
      %s113 = scalar_select %p110, %s111, %s112
      %p116 = pneg %p110
      %p117 = scmp.eq.s32.totalorder %s9, 7
      %p118 = por %p116, %p117
      %p119 = scmp.ne.s32.totalorder %s111, %s114
      %p120 = scmp.eq.s32.totalorder %s9, 0
      %p121 = por %p119, %p120
      %p122 = scmp.ne.s32.totalorder %s111, %s114
      %p123 = scmp.eq.s32.totalorder %s14, 7
      %p124 = por %p122, %p123
      %p125 = scmp.ne.s32.totalorder %s114, %s115
      %p126 = scmp.eq.s32.totalorder %s14, 0
      %p127 = por %p125, %p126
      %p128 = scmp.ne.s32.totalorder %s114, %s115
      %p129 = scmp.eq.s32.totalorder %s15, 7
      %p130 = por %p128, %p129
      %p132 = scmp.ne.s32.totalorder %s115, %s131
      %p133 = scmp.eq.s32.totalorder %s15, 0
      %p134 = por %p132, %p133
      %p135 = scmp.le.s32.totalorder 1, %s9
      %p136 = scmp.lt.s32.totalorder %s9, 9
      %p137 = pnand %p135, %p136
      %p138 = pneg %p137
      // Predicated region
      $region9: #{tpu_custom_call.1} parent=5 // pred_check
        _
      $region10: #{tpu_custom_call.1} parent=5 // pred_check_branch
        %140 = sbr.rel (%p137) target = $region12
      $region11: #{tpu_custom_call.1} parent=5 // pred_region
        %s141 = ssub.s32 %s9, 1
      $region12: #{tpu_custom_call.1} parent=5 // pred_fallthru
        _
      %p142 = scmp.lt.s32.totalorder %s9, 8
      // Predicated region
      $region13: #{tpu_custom_call.1} parent=5 // pred_check
        %p143 = pneg %p142
      $region14: #{tpu_custom_call.1} parent=5 // pred_check_branch
        %145 = sbr.rel (%p143) target = $region16
      $region15: #{tpu_custom_call.1} parent=5 // pred_region
        // Predicated region
        $region17: #{tpu_custom_call.1} parent=15 // pred_check
          %p146 = pneg %p41
        $region18: #{tpu_custom_call.1} parent=15 // pred_check_branch
          %148 = sbr.rel (%p146) target = $region20
        $region19: #{tpu_custom_call.1} parent=15 // pred_region
          %p149 = scmp.lt.s32.totalorder %s16, 1
          %s150 = scalar_select %p149, %s16, 1
          %s151 = smul.addr %s150, 3
          %s152 = smul.addr %s151, 2
          %s153 = scalar_lea.vmem %s0, %s152
        $region20: #{tpu_custom_call.1} parent=15 // pred_fallthru
          _
        // Predicated region
        $region21: #{tpu_custom_call.1} parent=15 // pred_check
          %p154 = pneg %p67
        $region22: #{tpu_custom_call.1} parent=15 // pred_check_branch
          %156 = sbr.rel (%p154) target = $region24
        $region23: #{tpu_custom_call.1} parent=15 // pred_region
          %s157 = sand.u32 %s57, 1
          %s158 = sand.u32 %s57, 1
          %s159 = smul.addr %s158, 36
          %s160 = scalar_lea.vmem [#allocation2], %s159
          %s161 = smul.addr %s17, 4
          %s162 = scalar_lea.vmem %s1, %s161
          // Predicated region
          $region25: #{tpu_custom_call.1} parent=23 // pred_check
            _
          $region26: #{tpu_custom_call.1} parent=23 // pred_check_branch
            %164 = sbr.rel (0) target = $region28
          $region27: #{tpu_custom_call.1} parent=23 // pred_region
            // Predicated region
            $region29: #{tpu_custom_call.1} parent=27 // pred_check
              _
            $region30: #{tpu_custom_call.1} parent=27 // pred_check_branch
              %166 = sbr.rel target = $region32
            $region31: #{tpu_custom_call.1} parent=27 // pred_region
              // Predicated region
              $region44: #{tpu_custom_call.1} parent=31 // pred_check
                _
              $region45: #{tpu_custom_call.1} parent=31 // pred_check_branch
                %198 = sbr.rel (0) target = $region47
              $region46: #{tpu_custom_call.1} parent=31 // pred_region
                loop: start=0, step=1, limit=1
                $region48: #{tpu_custom_call.1} parent=46 // loop_pre_header
                  _
                $region49: #{tpu_custom_call.1} parent=46 // loop_header
                  %s200 = sphi 0, %s204
                  %p201 = scmp.ge.s32.totalorder %s200, 1
                  %s205 = sphi %s162, %s162
                  %s206 = sphi %s160, %s160
                $region50: #{tpu_custom_call.1} parent=46 // loop_header_branch
                  %203 = sbr.rel (%p201) target = $region54
                $region51: #{tpu_custom_call.1} parent=46 // loop_body
                  _
                $region52: #{tpu_custom_call.1} parent=46 // loop_footer
                  %s204 = sadd.s32 1, %s200
                $region53: #{tpu_custom_call.1} parent=46 // loop_footer_branch
                  %199 = sbr.rel target = $region49
                $region54: #{tpu_custom_call.1} parent=46 // loop_exit
                  _
                %s208 = ssub.s32 16, 1
                loop: start=0, step=1, limit=1
                $region55: #{tpu_custom_call.1} parent=46 // loop_pre_header
                  _
                $region56: #{tpu_custom_call.1} parent=46 // loop_header
                  %s210 = sphi 0, %s214
                  %p211 = scmp.ge.s32.totalorder %s210, 1
                  %s215 = sphi %s162, %s162
                  %s216 = sphi %s160, %s160
                $region57: #{tpu_custom_call.1} parent=46 // loop_header_branch
                  %213 = sbr.rel (%p211) target = $region61
                $region58: #{tpu_custom_call.1} parent=46 // loop_body
                  %v217 = vld [vmem:[%s215] sm:%s208]
                  %218 = vst [vmem:[%s216] sm:%s208] %v217
                  %v219 = vld [vmem:[%s215 + $0x10] sm:%s208]
                  %220 = vst [vmem:[%s216 + $0x4] sm:%s208] %v219
                  %v221 = vld [vmem:[%s215 + $0x20] sm:%s208]
                  %222 = vst [vmem:[%s216 + $0x8] sm:%s208] %v221
                  %v223 = vld [vmem:[%s215 + $0x30] sm:%s208]
                  %224 = vst [vmem:[%s216 + $0xc] sm:%s208] %v223
                  %v225 = vld [vmem:[%s215 + $0x40] sm:%s208]
                  %226 = vst [vmem:[%s216 + $0x10] sm:%s208] %v225
                  %v227 = vld [vmem:[%s215 + $0x50] sm:%s208]
                  %228 = vst [vmem:[%s216 + $0x14] sm:%s208] %v227
                  %v229 = vld [vmem:[%s215 + $0x60] sm:%s208]
                  %230 = vst [vmem:[%s216 + $0x18] sm:%s208] %v229
                  %v231 = vld [vmem:[%s215 + $0x70] sm:%s208]
                  %232 = vst [vmem:[%s216 + $0x1c] sm:%s208] %v231
                  %v233 = vld [vmem:[%s215 + $0x80] sm:%s208]
                  %234 = vst [vmem:[%s216 + $0x20] sm:%s208] %v233
                $region59: #{tpu_custom_call.1} parent=46 // loop_footer
                  %s214 = sadd.s32 1, %s210
                $region60: #{tpu_custom_call.1} parent=46 // loop_footer_branch
                  %209 = sbr.rel target = $region56
                $region61: #{tpu_custom_call.1} parent=46 // loop_exit
                  _
              $region47: #{tpu_custom_call.1} parent=31 // pred_fallthru
                _
            $region32: #{tpu_custom_call.1} parent=27 // pred_fallthru
              _
            // Predicated region
            $region33: #{tpu_custom_call.1} parent=27 // pred_check
              _
            $region34: #{tpu_custom_call.1} parent=27 // pred_check_branch
              %168 = sbr.rel (0) target = $region36
            $region35: #{tpu_custom_call.1} parent=27 // pred_region
              %s170 = ssub.s32 16, 1
              loop: start=0, step=1, limit=1
              $region37: #{tpu_custom_call.1} parent=35 // loop_pre_header
                _
              $region38: #{tpu_custom_call.1} parent=35 // loop_header
                %s172 = sphi 0, %s176
                %p173 = scmp.ge.s32.totalorder %s172, 1
                %s177 = sphi %s162, %s162
                %s178 = sphi %s160, %s160
              $region39: #{tpu_custom_call.1} parent=35 // loop_header_branch
                %175 = sbr.rel (%p173) target = $region43
              $region40: #{tpu_custom_call.1} parent=35 // loop_body
                %v179 = vld [vmem:[%s177] sm:%s170]
                %180 = vst [vmem:[%s178] sm:%s170] %v179
                %v181 = vld [vmem:[%s177 + $0x10] sm:%s170]
                %182 = vst [vmem:[%s178 + $0x4] sm:%s170] %v181
                %v183 = vld [vmem:[%s177 + $0x20] sm:%s170]
                %184 = vst [vmem:[%s178 + $0x8] sm:%s170] %v183
                %v185 = vld [vmem:[%s177 + $0x30] sm:%s170]
                %186 = vst [vmem:[%s178 + $0xc] sm:%s170] %v185
                %v187 = vld [vmem:[%s177 + $0x40] sm:%s170]
                %188 = vst [vmem:[%s178 + $0x10] sm:%s170] %v187
                %v189 = vld [vmem:[%s177 + $0x50] sm:%s170]
                %190 = vst [vmem:[%s178 + $0x14] sm:%s170] %v189
                %v191 = vld [vmem:[%s177 + $0x60] sm:%s170]
                %192 = vst [vmem:[%s178 + $0x18] sm:%s170] %v191
                %v193 = vld [vmem:[%s177 + $0x70] sm:%s170]
                %194 = vst [vmem:[%s178 + $0x1c] sm:%s170] %v193
                %v195 = vld [vmem:[%s177 + $0x80] sm:%s170]
                %196 = vst [vmem:[%s178 + $0x20] sm:%s170] %v195
              $region41: #{tpu_custom_call.1} parent=35 // loop_footer
                %s176 = sadd.s32 1, %s172
              $region42: #{tpu_custom_call.1} parent=35 // loop_footer_branch
                %171 = sbr.rel target = $region38
              $region43: #{tpu_custom_call.1} parent=35 // loop_exit
                _
            $region36: #{tpu_custom_call.1} parent=27 // pred_fallthru
              _
          $region28: #{tpu_custom_call.1} parent=23 // pred_fallthru
            _
          %235 = vnop
        $region24: #{tpu_custom_call.1} parent=15 // pred_fallthru
          _
        // Predicated region
        $region62: #{tpu_custom_call.1} parent=15 // pred_check
          %p236 = pneg %p93
        $region63: #{tpu_custom_call.1} parent=15 // pred_check_branch
          %238 = sbr.rel (%p236) target = $region65
        $region64: #{tpu_custom_call.1} parent=15 // pred_region
          %p239 = scmp.lt.s32.totalorder %s17, 3
          %s240 = scalar_select %p239, %s17, 3
          %s241 = smul.addr %s240, 8
          %s242 = scalar_lea.vmem %s2, %s241
        $region65: #{tpu_custom_call.1} parent=15 // pred_fallthru
          _
      $region16: #{tpu_custom_call.1} parent=5 // pred_fallthru
        _
      %p243 = scmp.le.s32.totalorder 1, %s9
      %p244 = scmp.lt.s32.totalorder %s9, 9
      %p245 = pnand %p243, %p244
      %p246 = pneg %p245
      // Predicated region
      $region66: #{tpu_custom_call.1} parent=5 // pred_check
        _
      $region67: #{tpu_custom_call.1} parent=5 // pred_check_branch
        %248 = sbr.rel (%p245) target = $region69
      $region68: #{tpu_custom_call.1} parent=5 // pred_region
        %s249 = ssub.s32 %s9, 1
        %s250 = sand.u32 %s60, 1
        %s251 = sand.u32 %s60, 1
        %s252 = smul.addr %s251, 36
        %s253 = scalar_lea.vmem [#allocation2], %s252
        // Predicated region
        $region70: #{tpu_custom_call.1} parent=68 // pred_check
          %p254 = pneg %p73
        $region71: #{tpu_custom_call.1} parent=68 // pred_check_branch
          %256 = sbr.rel (%p254) target = $region73
        $region72: #{tpu_custom_call.1} parent=68 // pred_region
          _
        $region73: #{tpu_custom_call.1} parent=68 // pred_fallthru
          _
        %p257 = scmp.lt.s32.totalorder %s18, 1
        %s258 = scalar_select %p257, %s18, 1
        %s259 = smul.addr %s258, 3
        %s260 = smul.addr %s259, 2
        %s261 = scalar_lea.vmem %s0, %s260
        %p262 = pneg %p47
        %p263 = pneg %p44
        %s264 = sand.u32 %s60, 1
        %s265 = sand.u32 %s60, 1
        %s266 = smul.addr %s265, 36
        %s267 = scalar_lea.vmem [#allocation2], %s266
        %p268 = pneg %p73
        %p269 = pneg %p70
        %p270 = scmp.lt.s32.totalorder %s19, 3
        %s271 = scalar_select %p270, %s19, 3
        %s272 = smul.addr %s271, 8
        %s273 = scalar_lea.vmem %s2, %s272
        %p274 = pneg %p99
        %p275 = pneg %p96
        %p276 = pneg %p127
        %p277 = pneg %p124
        %s278 = smul.u32 8, %s19
        %p279 = scmp.lt.s32.totalorder %s18, 1
        %s280 = scalar_select %p279, %s18, 1
        %p281 = scmp.lt.s32.totalorder %s278, 31
        %s282 = scalar_select %p281, %s278, 31
        %s283 = smul.addr %s282, 2
        %s284 = smul.addr %s280, 64
        %s285 = sadd.s32 %s283, %s284
        %s286 = smul.addr %s285, 8
        %s287 = scalar_lea.vmem %s3, %s286
        %p288 = scmp.lt.s32.totalorder %s18, 1
        %s289 = scalar_select %p288, %s18, 1
        %s290 = smul.addr %s289, 3
        %s291 = smul.addr %s290, 2
        %s292 = scalar_lea.vmem %s0, %s291
        %p293 = scmp.lt.s32.totalorder %s19, 3
        %s294 = scalar_select %p293, %s19, 3
        %s295 = smul.addr %s294, 8
        %s296 = scalar_lea.vmem %s2, %s295
        %s297 = smul.u32 8, %s19
        %p298 = scmp.lt.s32.totalorder %s18, 1
        %s299 = scalar_select %p298, %s18, 1
        %p300 = scmp.lt.s32.totalorder %s297, 31
        %s301 = scalar_select %p300, %s297, 31
        %s302 = smul.addr %s301, 2
        %s303 = smul.addr %s299, 64
        %s304 = sadd.s32 %s302, %s303
        %s305 = smul.addr %s304, 8
        %s306 = scalar_lea.vmem %s3, %s305
        %s307 = smul.u32 8, %s19
        %v309 = vld [vmem:[%s296] sm:$0xff]
        %311 = vset.pattern.permute.xlu0 0
        %312 = vperm.xlu0 %311, %v309
        %v313 = vpop.permute.xlu0 %312
        %v315 = vld [vmem:[%s292] sm:$0xf]
        %v316 = vld [vmem:[%s253] sm:$0xf]
        %318 = vst [vmem:[#allocation1] ss:$4 sm:$0xff] %v315
        %v319 = vld.sshfl [vmem:[#allocation1] sm:$0xff pattern:$0x73625140]
        %v320 = vld.sshfl [vmem:[#allocation1 + $0x8] sm:$0xff pattern:$0x73625140]
        %vm321 = vcmask 31744
        %v323 = vsel %vm321, %v316, 0
        %vm325 = vcmask 1041408
        %v326 = vsel %vm325, %v319, 0
        %v328 = vsel %vm325, %v320, 0
        %330 = vmatpush.bf16.msra.mxu0 0
        %331 = vmatpush.bf16.msra.mxu0 0
        %332 = vmatpush.bf16.msra.mxu0 0
        %333 = vmatpush.bf16.msra.mxu0 0
        %334 = vmatpush.bf16.msra.mxu0 0
        %335 = vmatpush.bf16.msra.mxu0 0
        %336 = vmatpush.bf16.msra.mxu0 0
        %337 = vmatpush.bf16.msra.mxu0 %v326
        %338 = vmatmul.bf16.gmra.mxu0 %v323
        %v339 = vpop.f32.mrf.mxu0
        %v340 = vadd.f32 0.0, %v339
        %v341 = vpop.f32.mrf.mxu0
        %342 = vdwg.mxu0
        %343 = vmatpush.bf16.msra.mxu0 0
        %344 = vmatpush.bf16.msra.mxu0 0
        %345 = vmatpush.bf16.msra.mxu0 0
        %346 = vmatpush.bf16.msra.mxu0 0
        %347 = vmatpush.bf16.msra.mxu0 0
        %348 = vmatpush.bf16.msra.mxu0 0
        %349 = vmatpush.bf16.msra.mxu0 0
        %350 = vmatpush.bf16.msra.mxu0 %v328
        %351 = vmatmul.bf16.gmra.mxu0 %v323
        %v352 = vpop.f32.mrf.mxu0
        %v353 = vadd.f32 0.0, %v352
        %v354 = vpop.f32.mrf.mxu0
        %355 = vdwg.mxu0
        %v356 = vadd.f32 %v313, %v340
        %v357 = vadd.f32 %v313, %v353
        %v358 = vld [vmem:[%s292] sm:$0xf]
        %s359 = scalar_lea.vmem %s253, 4 [#allocation2]
        %v360 = vld [vmem:[%s359] sm:$0xf]
        %362 = vst [vmem:[#allocation1] ss:$4 sm:$0xff] %v358
        %v363 = vld.sshfl [vmem:[#allocation1] sm:$0xff pattern:$0x73625140]
        %v365 = vld.sshfl [vmem:[#allocation1 + $0x8] sm:$0xff pattern:$0x73625140]
        %367 = vrot.lane.b32.xlu0 %v363, 127
        %v368 = vpop.permute.xlu0 %367
        %369 = vrot.lane.b32.xlu0 %v365, 127
        %v370 = vpop.permute.xlu0 %369
        %vm371 = vcmask 1039360
        %v372 = vsel %vm371, %v368, %v370
        %v374 = vsel %vm321, %v360, 0
        %v377 = vsel %vm325, %v372, 0
        %v380 = vsel %vm325, %v370, 0
        %382 = vmatpush.bf16.msra.mxu0 0
        %383 = vmatpush.bf16.msra.mxu0 0
        %384 = vmatpush.bf16.msra.mxu0 0
        %385 = vmatpush.bf16.msra.mxu0 0
        %386 = vmatpush.bf16.msra.mxu0 0
        %387 = vmatpush.bf16.msra.mxu0 0
        %388 = vmatpush.bf16.msra.mxu0 0
        %389 = vmatpush.bf16.msra.mxu0 %v377
        %390 = vmatmul.bf16.gmra.mxu0 %v374
        %v391 = vpop.f32.mrf.mxu0
        %v392 = vadd.f32 0.0, %v391
        %v393 = vpop.f32.mrf.mxu0
        %394 = vdwg.mxu0
        %395 = vmatpush.bf16.msra.mxu0 0
        %396 = vmatpush.bf16.msra.mxu0 0
        %397 = vmatpush.bf16.msra.mxu0 0
        %398 = vmatpush.bf16.msra.mxu0 0
        %399 = vmatpush.bf16.msra.mxu0 0
        %400 = vmatpush.bf16.msra.mxu0 0
        %401 = vmatpush.bf16.msra.mxu0 0
        %402 = vmatpush.bf16.msra.mxu0 %v380
        %403 = vmatmul.bf16.gmra.mxu0 %v374
        %v404 = vpop.f32.mrf.mxu0
        %v405 = vadd.f32 0.0, %v404
        %v406 = vpop.f32.mrf.mxu0
        %407 = vdwg.mxu0
        %v408 = vadd.f32 %v356, %v392
        %v409 = vadd.f32 %v357, %v405
        %v410 = vld [vmem:[%s292] sm:$0xf]
        %s411 = scalar_lea.vmem %s253, 8 [#allocation2]
        %v412 = vld [vmem:[%s411] sm:$0xf]
        %414 = vst [vmem:[#allocation1] ss:$4 sm:$0xff] %v410
        %v415 = vld.sshfl [vmem:[#allocation1] sm:$0xff pattern:$0x73625140]
        %v417 = vld.sshfl [vmem:[#allocation1 + $0x8] sm:$0xff pattern:$0x73625140]
        %419 = vrot.lane.b32.xlu0 %v415, 126
        %v420 = vpop.permute.xlu0 %419
        %421 = vrot.lane.b32.xlu0 %v417, 126
        %v422 = vpop.permute.xlu0 %421
        %vm423 = vcmask 1031168
        %v424 = vsel %vm423, %v420, %v422
        %v426 = vsel %vm321, %v412, 0
        %v429 = vsel %vm325, %v424, 0
        %v432 = vsel %vm325, %v422, 0
        %434 = vmatpush.bf16.msra.mxu0 0
        %435 = vmatpush.bf16.msra.mxu0 0
        %436 = vmatpush.bf16.msra.mxu0 0
        %437 = vmatpush.bf16.msra.mxu0 0
        %438 = vmatpush.bf16.msra.mxu0 0
        %439 = vmatpush.bf16.msra.mxu0 0
        %440 = vmatpush.bf16.msra.mxu0 0
        %441 = vmatpush.bf16.msra.mxu0 %v429
        %442 = vmatmul.bf16.gmra.mxu0 %v426
        %v443 = vpop.f32.mrf.mxu0
        %v444 = vadd.f32 0.0, %v443
        %v445 = vpop.f32.mrf.mxu0
        %446 = vdwg.mxu0
        %447 = vmatpush.bf16.msra.mxu0 0
        %448 = vmatpush.bf16.msra.mxu0 0
        %449 = vmatpush.bf16.msra.mxu0 0
        %450 = vmatpush.bf16.msra.mxu0 0
        %451 = vmatpush.bf16.msra.mxu0 0
        %452 = vmatpush.bf16.msra.mxu0 0
        %453 = vmatpush.bf16.msra.mxu0 0
        %454 = vmatpush.bf16.msra.mxu0 %v432
        %455 = vmatmul.bf16.gmra.mxu0 %v426
        %v456 = vpop.f32.mrf.mxu0
        %v457 = vadd.f32 0.0, %v456
        %v458 = vpop.f32.mrf.mxu0
        %459 = vdwg.mxu0
        %v460 = vadd.f32 %v408, %v444
        %v461 = vadd.f32 %v409, %v457
        %v462 = vld [vmem:[%s292] sm:$0xf]
        %s463 = scalar_lea.vmem %s253, 12 [#allocation2]
        %v464 = vld [vmem:[%s463] sm:$0xf]
        %466 = vst [vmem:[#allocation1] ss:$4 sm:$0xff] %v462
        %v467 = vld.sshfl [vmem:[#allocation1] sm:$0xff pattern:$0x73625140]
        %v469 = vld.sshfl [vmem:[#allocation1 + $0x8] sm:$0xff pattern:$0x73625140]
        %471 = vrot.lane.b32.xlu0 %v467, 112
        %v472 = vpop.permute.xlu0 %471
        %473 = vrot.lane.b32.xlu0 %v469, 112
        %v474 = vpop.permute.xlu0 %473
        %vm475 = vcmask 916480
        %v476 = vsel %vm475, %v472, %v474
        %v478 = vsel %vm321, %v464, 0
        %v481 = vsel %vm325, %v476, 0
        %v484 = vsel %vm325, %v474, 0
        %486 = vmatpush.bf16.msra.mxu0 0
        %487 = vmatpush.bf16.msra.mxu0 0
        %488 = vmatpush.bf16.msra.mxu0 0
        %489 = vmatpush.bf16.msra.mxu0 0
        %490 = vmatpush.bf16.msra.mxu0 0
        %491 = vmatpush.bf16.msra.mxu0 0
        %492 = vmatpush.bf16.msra.mxu0 0
        %493 = vmatpush.bf16.msra.mxu0 %v481
        %494 = vmatmul.bf16.gmra.mxu0 %v478
        %v495 = vpop.f32.mrf.mxu0
        %v496 = vadd.f32 0.0, %v495
        %v497 = vpop.f32.mrf.mxu0
        %498 = vdwg.mxu0
        %499 = vmatpush.bf16.msra.mxu0 0
        %500 = vmatpush.bf16.msra.mxu0 0
        %501 = vmatpush.bf16.msra.mxu0 0
        %502 = vmatpush.bf16.msra.mxu0 0
        %503 = vmatpush.bf16.msra.mxu0 0
        %504 = vmatpush.bf16.msra.mxu0 0
        %505 = vmatpush.bf16.msra.mxu0 0
        %506 = vmatpush.bf16.msra.mxu0 %v484
        %507 = vmatmul.bf16.gmra.mxu0 %v478
        %v508 = vpop.f32.mrf.mxu0
        %v509 = vadd.f32 0.0, %v508
        %v510 = vpop.f32.mrf.mxu0
        %511 = vdwg.mxu0
        %v512 = vadd.f32 %v460, %v496
        %v513 = vadd.f32 %v461, %v509
        %v514 = vld [vmem:[%s292] sm:$0xf]
        %s515 = scalar_lea.vmem %s253, 16 [#allocation2]
        %v516 = vld [vmem:[%s515] sm:$0xf]
        %518 = vst [vmem:[#allocation1] ss:$4 sm:$0xff] %v514
        %v519 = vld.sshfl [vmem:[#allocation1] sm:$0xff pattern:$0x73625140]
        %v521 = vld.sshfl [vmem:[#allocation1 + $0x8] sm:$0xff pattern:$0x73625140]
        %523 = vrot.lane.b32.xlu0 %v519, 111
        %v524 = vpop.permute.xlu0 %523
        %525 = vrot.lane.b32.xlu0 %v521, 111
        %v526 = vpop.permute.xlu0 %525
        %vm527 = vcmask 908288
        %v528 = vsel %vm527, %v524, %v526
        %v530 = vsel %vm321, %v516, 0
        %v533 = vsel %vm325, %v528, 0
        %v536 = vsel %vm325, %v526, 0
        %538 = vmatpush.bf16.msra.mxu0 0
        %539 = vmatpush.bf16.msra.mxu0 0
        %540 = vmatpush.bf16.msra.mxu0 0
        %541 = vmatpush.bf16.msra.mxu0 0
        %542 = vmatpush.bf16.msra.mxu0 0
        %543 = vmatpush.bf16.msra.mxu0 0
        %544 = vmatpush.bf16.msra.mxu0 0
        %545 = vmatpush.bf16.msra.mxu0 %v533
        %546 = vmatmul.bf16.gmra.mxu0 %v530
        %v547 = vpop.f32.mrf.mxu0
        %v548 = vadd.f32 0.0, %v547
        %v549 = vpop.f32.mrf.mxu0
        %550 = vdwg.mxu0
        %551 = vmatpush.bf16.msra.mxu0 0
        %552 = vmatpush.bf16.msra.mxu0 0
        %553 = vmatpush.bf16.msra.mxu0 0
        %554 = vmatpush.bf16.msra.mxu0 0
        %555 = vmatpush.bf16.msra.mxu0 0
        %556 = vmatpush.bf16.msra.mxu0 0
        %557 = vmatpush.bf16.msra.mxu0 0
        %558 = vmatpush.bf16.msra.mxu0 %v536
        %559 = vmatmul.bf16.gmra.mxu0 %v530
        %v560 = vpop.f32.mrf.mxu0
        %v561 = vadd.f32 0.0, %v560
        %v562 = vpop.f32.mrf.mxu0
        %563 = vdwg.mxu0
        %v564 = vadd.f32 %v512, %v548
        %v565 = vadd.f32 %v513, %v561
        %v566 = vld [vmem:[%s292] sm:$0xf]
        %s567 = scalar_lea.vmem %s253, 20 [#allocation2]
        %v568 = vld [vmem:[%s567] sm:$0xf]
        %570 = vst [vmem:[#allocation1] ss:$4 sm:$0xff] %v566
        %v571 = vld.sshfl [vmem:[#allocation1] sm:$0xff pattern:$0x73625140]
        %v573 = vld.sshfl [vmem:[#allocation1 + $0x8] sm:$0xff pattern:$0x73625140]
        %575 = vrot.lane.b32.xlu0 %v571, 110
        %v576 = vpop.permute.xlu0 %575
        %577 = vrot.lane.b32.xlu0 %v573, 110
        %v578 = vpop.permute.xlu0 %577
        %vm579 = vcmask 900096
        %v580 = vsel %vm579, %v576, %v578
        %v582 = vsel %vm321, %v568, 0
        %v585 = vsel %vm325, %v580, 0
        %v588 = vsel %vm325, %v578, 0
        %590 = vmatpush.bf16.msra.mxu0 0
        %591 = vmatpush.bf16.msra.mxu0 0
        %592 = vmatpush.bf16.msra.mxu0 0
        %593 = vmatpush.bf16.msra.mxu0 0
        %594 = vmatpush.bf16.msra.mxu0 0
        %595 = vmatpush.bf16.msra.mxu0 0
        %596 = vmatpush.bf16.msra.mxu0 0
        %597 = vmatpush.bf16.msra.mxu0 %v585
        %598 = vmatmul.bf16.gmra.mxu0 %v582
        %v599 = vpop.f32.mrf.mxu0
        %v600 = vadd.f32 0.0, %v599
        %v601 = vpop.f32.mrf.mxu0
        %602 = vdwg.mxu0
        %603 = vmatpush.bf16.msra.mxu0 0
        %604 = vmatpush.bf16.msra.mxu0 0
        %605 = vmatpush.bf16.msra.mxu0 0
        %606 = vmatpush.bf16.msra.mxu0 0
        %607 = vmatpush.bf16.msra.mxu0 0
        %608 = vmatpush.bf16.msra.mxu0 0
        %609 = vmatpush.bf16.msra.mxu0 0
        %610 = vmatpush.bf16.msra.mxu0 %v588
        %611 = vmatmul.bf16.gmra.mxu0 %v582
        %v612 = vpop.f32.mrf.mxu0
        %v613 = vadd.f32 0.0, %v612
        %v614 = vpop.f32.mrf.mxu0
        %615 = vdwg.mxu0
        %v616 = vadd.f32 %v564, %v600
        %v617 = vadd.f32 %v565, %v613
        %v618 = vld [vmem:[%s292] sm:$0xf]
        %s619 = scalar_lea.vmem %s253, 24 [#allocation2]
        %v620 = vld [vmem:[%s619] sm:$0xf]
        %622 = vst [vmem:[#allocation1] ss:$4 sm:$0xff] %v618
        %v623 = vld.sshfl [vmem:[#allocation1] sm:$0xff pattern:$0x73625140]
        %v625 = vld.sshfl [vmem:[#allocation1 + $0x8] sm:$0xff pattern:$0x73625140]
        %627 = vrot.lane.b32.xlu0 %v623, 96
        %v628 = vpop.permute.xlu0 %627
        %629 = vrot.lane.b32.xlu0 %v625, 96
        %v630 = vpop.permute.xlu0 %629
        %vm631 = vcmask 785408
        %v632 = vsel %vm631, %v628, %v630
        %v634 = vsel %vm321, %v620, 0
        %v637 = vsel %vm325, %v632, 0
        %v640 = vsel %vm325, %v630, 0
        %642 = vmatpush.bf16.msra.mxu0 0
        %643 = vmatpush.bf16.msra.mxu0 0
        %644 = vmatpush.bf16.msra.mxu0 0
        %645 = vmatpush.bf16.msra.mxu0 0
        %646 = vmatpush.bf16.msra.mxu0 0
        %647 = vmatpush.bf16.msra.mxu0 0
        %648 = vmatpush.bf16.msra.mxu0 0
        %649 = vmatpush.bf16.msra.mxu0 %v637
        %650 = vmatmul.bf16.gmra.mxu0 %v634
        %v651 = vpop.f32.mrf.mxu0
        %v652 = vadd.f32 0.0, %v651
        %v653 = vpop.f32.mrf.mxu0
        %654 = vdwg.mxu0
        %655 = vmatpush.bf16.msra.mxu0 0
        %656 = vmatpush.bf16.msra.mxu0 0
        %657 = vmatpush.bf16.msra.mxu0 0
        %658 = vmatpush.bf16.msra.mxu0 0
        %659 = vmatpush.bf16.msra.mxu0 0
        %660 = vmatpush.bf16.msra.mxu0 0
        %661 = vmatpush.bf16.msra.mxu0 0
        %662 = vmatpush.bf16.msra.mxu0 %v640
        %663 = vmatmul.bf16.gmra.mxu0 %v634
        %v664 = vpop.f32.mrf.mxu0
        %v665 = vadd.f32 0.0, %v664
        %v666 = vpop.f32.mrf.mxu0
        %667 = vdwg.mxu0
        %v668 = vadd.f32 %v616, %v652
        %v669 = vadd.f32 %v617, %v665
        %v670 = vld [vmem:[%s292] sm:$0x3f]
        %s671 = scalar_lea.vmem %s253, 28 [#allocation2]
        %v672 = vld [vmem:[%s671] sm:$0xf]
        %674 = vst [vmem:[#allocation1] ss:$4 sm:$0xff] %v670
        %v675 = vld.sshfl [vmem:[#allocation1] sm:$0xff pattern:$0x73625140]
        %v677 = vld.sshfl [vmem:[#allocation1 + $0x8] sm:$0xff pattern:$0x73625140]
        %v679 = vld.sshfl [vmem:[#allocation1 + $0x10] sm:$0xff pattern:$0x73625140]
        %681 = vrot.lane.b32.xlu0 %v675, 95
        %v682 = vpop.permute.xlu0 %681
        %683 = vrot.lane.b32.xlu0 %v677, 95
        %v684 = vpop.permute.xlu0 %683
        %685 = vrot.lane.b32.xlu0 %v679, 95
        %v686 = vpop.permute.xlu0 %685
        %vm687 = vcmask 777216
        %v688 = vsel %vm687, %v682, %v684
        %v689 = vsel %vm687, %v684, %v686
        %v691 = vsel %vm321, %v672, 0
        %v694 = vsel %vm325, %v688, 0
        %v697 = vsel %vm325, %v689, 0
        %699 = vmatpush.bf16.msra.mxu0 0
        %700 = vmatpush.bf16.msra.mxu0 0
        %701 = vmatpush.bf16.msra.mxu0 0
        %702 = vmatpush.bf16.msra.mxu0 0
        %703 = vmatpush.bf16.msra.mxu0 0
        %704 = vmatpush.bf16.msra.mxu0 0
        %705 = vmatpush.bf16.msra.mxu0 0
        %706 = vmatpush.bf16.msra.mxu0 %v694
        %707 = vmatmul.bf16.gmra.mxu0 %v691
        %v708 = vpop.f32.mrf.mxu0
        %v709 = vadd.f32 0.0, %v708
        %v710 = vpop.f32.mrf.mxu0
        %711 = vdwg.mxu0
        %712 = vmatpush.bf16.msra.mxu0 0
        %713 = vmatpush.bf16.msra.mxu0 0
        %714 = vmatpush.bf16.msra.mxu0 0
        %715 = vmatpush.bf16.msra.mxu0 0
        %716 = vmatpush.bf16.msra.mxu0 0
        %717 = vmatpush.bf16.msra.mxu0 0
        %718 = vmatpush.bf16.msra.mxu0 0
        %719 = vmatpush.bf16.msra.mxu0 %v697
        %720 = vmatmul.bf16.gmra.mxu0 %v691
        %v721 = vpop.f32.mrf.mxu0
        %v722 = vadd.f32 0.0, %v721
        %v723 = vpop.f32.mrf.mxu0
        %724 = vdwg.mxu0
        %v725 = vadd.f32 %v668, %v709
        %v726 = vadd.f32 %v669, %v722
        %v727 = vld [vmem:[%s292] sm:$0x3f]
        %s728 = scalar_lea.vmem %s253, 32 [#allocation2]
        %v729 = vld [vmem:[%s728] sm:$0xf]
        %731 = vst [vmem:[#allocation1] ss:$4 sm:$0xff] %v727
        %v732 = vld.sshfl [vmem:[#allocation1] sm:$0xff pattern:$0x73625140]
        %v734 = vld.sshfl [vmem:[#allocation1 + $0x8] sm:$0xff pattern:$0x73625140]
        %v736 = vld.sshfl [vmem:[#allocation1 + $0x10] sm:$0xff pattern:$0x73625140]
        %738 = vrot.lane.b32.xlu0 %v732, 94
        %v739 = vpop.permute.xlu0 %738
        %740 = vrot.lane.b32.xlu0 %v734, 94
        %v741 = vpop.permute.xlu0 %740
        %742 = vrot.lane.b32.xlu0 %v736, 94
        %v743 = vpop.permute.xlu0 %742
        %vm744 = vcmask 769024
        %v745 = vsel %vm744, %v739, %v741
        %v746 = vsel %vm744, %v741, %v743
        %v748 = vsel %vm321, %v729, 0
        %v751 = vsel %vm325, %v745, 0
        %v754 = vsel %vm325, %v746, 0
        %756 = vmatpush.bf16.msra.mxu0 0
        %757 = vmatpush.bf16.msra.mxu0 0
        %758 = vmatpush.bf16.msra.mxu0 0
        %759 = vmatpush.bf16.msra.mxu0 0
        %760 = vmatpush.bf16.msra.mxu0 0
        %761 = vmatpush.bf16.msra.mxu0 0
        %762 = vmatpush.bf16.msra.mxu0 0
        %763 = vmatpush.bf16.msra.mxu0 %v751
        %764 = vmatmul.bf16.gmra.mxu0 %v748
        %v765 = vpop.f32.mrf.mxu0
        %v766 = vadd.f32 0.0, %v765
        %v767 = vpop.f32.mrf.mxu0
        %768 = vdwg.mxu0
        %769 = vmatpush.bf16.msra.mxu0 0
        %770 = vmatpush.bf16.msra.mxu0 0
        %771 = vmatpush.bf16.msra.mxu0 0
        %772 = vmatpush.bf16.msra.mxu0 0
        %773 = vmatpush.bf16.msra.mxu0 0
        %774 = vmatpush.bf16.msra.mxu0 0
        %775 = vmatpush.bf16.msra.mxu0 0
        %776 = vmatpush.bf16.msra.mxu0 %v754
        %777 = vmatmul.bf16.gmra.mxu0 %v748
        %v778 = vpop.f32.mrf.mxu0
        %v779 = vadd.f32 0.0, %v778
        %v780 = vpop.f32.mrf.mxu0
        %781 = vdwg.mxu0
        %v782 = vadd.f32 %v725, %v766
        %v783 = vadd.f32 %v726, %v779
        %v785 = vrot.slane %v782, 1
        %v786 = vrot.slane %v782, 2
        %v787 = vrot.slane %v782, 3
        %v788 = vrot.slane %v782, 4
        %v789 = vrot.slane %v782, 5
        %v790 = vrot.slane %v782, 6
        %v791 = vrot.slane %v782, 7
        %vm799 = vcmask 106496
        %800 = vst.msk [vmem:[%s306] sm:$0x1] %vm799, %v782
        %801 = vst.msk [vmem:[%s306 + $0x10] sm:$0x1] %vm799, %v785
        %802 = vst.msk [vmem:[%s306 + $0x20] sm:$0x1] %vm799, %v786
        %803 = vst.msk [vmem:[%s306 + $0x30] sm:$0x1] %vm799, %v787
        %804 = vst.msk [vmem:[%s306 + $0x40] sm:$0x1] %vm799, %v788
        %805 = vst.msk [vmem:[%s306 + $0x50] sm:$0x1] %vm799, %v789
        %806 = vst.msk [vmem:[%s306 + $0x60] sm:$0x1] %vm799, %v790
        %807 = vst.msk [vmem:[%s306 + $0x70] sm:$0x1] %vm799, %v791
        %v808 = vperm.slane %v782, 0
        %v809 = vperm.slane %v785, 0
        %v810 = vperm.slane %v786, 0
        %v811 = vperm.slane %v787, 0
        %v812 = vperm.slane %v788, 0
        %v813 = vperm.slane %v789, 0
        %v814 = vperm.slane %v790, 0
        %v815 = vperm.slane %v791, 0
        %816 = vrot.lane.b32.xlu0 %v808, 112
        %v817 = vpop.permute.xlu0 %816
        %818 = vrot.lane.b32.xlu0 %v809, 112
        %v819 = vpop.permute.xlu0 %818
        %820 = vrot.lane.b32.xlu0 %v810, 112
        %v821 = vpop.permute.xlu0 %820
        %822 = vrot.lane.b32.xlu0 %v811, 112
        %v823 = vpop.permute.xlu0 %822
        %824 = vrot.lane.b32.xlu0 %v812, 112
        %v825 = vpop.permute.xlu0 %824
        %826 = vrot.lane.b32.xlu0 %v813, 112
        %v827 = vpop.permute.xlu0 %826
        %828 = vrot.lane.b32.xlu0 %v814, 112
        %v829 = vpop.permute.xlu0 %828
        %830 = vrot.lane.b32.xlu0 %v815, 112
        %v831 = vpop.permute.xlu0 %830
        %840 = vst.msk [vmem:[%s306 + $0x1] sm:$0x1] %vm799, %v817
        %841 = vst.msk [vmem:[%s306 + $0x11] sm:$0x1] %vm799, %v819
        %842 = vst.msk [vmem:[%s306 + $0x21] sm:$0x1] %vm799, %v821
        %843 = vst.msk [vmem:[%s306 + $0x31] sm:$0x1] %vm799, %v823
        %844 = vst.msk [vmem:[%s306 + $0x41] sm:$0x1] %vm799, %v825
        %845 = vst.msk [vmem:[%s306 + $0x51] sm:$0x1] %vm799, %v827
        %846 = vst.msk [vmem:[%s306 + $0x61] sm:$0x1] %vm799, %v829
        %847 = vst.msk [vmem:[%s306 + $0x71] sm:$0x1] %vm799, %v831
        %848 = vrot.lane.b32.xlu0 %v808, 96
        %v849 = vpop.permute.xlu0 %848
        %850 = vrot.lane.b32.xlu0 %v809, 96
        %v851 = vpop.permute.xlu0 %850
        %852 = vrot.lane.b32.xlu0 %v810, 96
        %v853 = vpop.permute.xlu0 %852
        %854 = vrot.lane.b32.xlu0 %v811, 96
        %v855 = vpop.permute.xlu0 %854
        %856 = vrot.lane.b32.xlu0 %v812, 96
        %v857 = vpop.permute.xlu0 %856
        %858 = vrot.lane.b32.xlu0 %v813, 96
        %v859 = vpop.permute.xlu0 %858
        %860 = vrot.lane.b32.xlu0 %v814, 96
        %v861 = vpop.permute.xlu0 %860
        %862 = vrot.lane.b32.xlu0 %v815, 96
        %v863 = vpop.permute.xlu0 %862
        %872 = vst.msk [vmem:[%s306 + $0x2] sm:$0x1] %vm799, %v849
        %873 = vst.msk [vmem:[%s306 + $0x12] sm:$0x1] %vm799, %v851
        %874 = vst.msk [vmem:[%s306 + $0x22] sm:$0x1] %vm799, %v853
        %875 = vst.msk [vmem:[%s306 + $0x32] sm:$0x1] %vm799, %v855
        %876 = vst.msk [vmem:[%s306 + $0x42] sm:$0x1] %vm799, %v857
        %877 = vst.msk [vmem:[%s306 + $0x52] sm:$0x1] %vm799, %v859
        %878 = vst.msk [vmem:[%s306 + $0x62] sm:$0x1] %vm799, %v861
        %879 = vst.msk [vmem:[%s306 + $0x72] sm:$0x1] %vm799, %v863
        %880 = vrot.lane.b32.xlu0 %v808, 80
        %v881 = vpop.permute.xlu0 %880
        %882 = vrot.lane.b32.xlu0 %v809, 80
        %v883 = vpop.permute.xlu0 %882
        %884 = vrot.lane.b32.xlu0 %v810, 80
        %v885 = vpop.permute.xlu0 %884
        %886 = vrot.lane.b32.xlu0 %v811, 80
        %v887 = vpop.permute.xlu0 %886
        %888 = vrot.lane.b32.xlu0 %v812, 80
        %v889 = vpop.permute.xlu0 %888
        %890 = vrot.lane.b32.xlu0 %v813, 80
        %v891 = vpop.permute.xlu0 %890
        %892 = vrot.lane.b32.xlu0 %v814, 80
        %v893 = vpop.permute.xlu0 %892
        %894 = vrot.lane.b32.xlu0 %v815, 80
        %v895 = vpop.permute.xlu0 %894
        %904 = vst.msk [vmem:[%s306 + $0x3] sm:$0x1] %vm799, %v881
        %905 = vst.msk [vmem:[%s306 + $0x13] sm:$0x1] %vm799, %v883
        %906 = vst.msk [vmem:[%s306 + $0x23] sm:$0x1] %vm799, %v885
        %907 = vst.msk [vmem:[%s306 + $0x33] sm:$0x1] %vm799, %v887
        %908 = vst.msk [vmem:[%s306 + $0x43] sm:$0x1] %vm799, %v889
        %909 = vst.msk [vmem:[%s306 + $0x53] sm:$0x1] %vm799, %v891
        %910 = vst.msk [vmem:[%s306 + $0x63] sm:$0x1] %vm799, %v893
        %911 = vst.msk [vmem:[%s306 + $0x73] sm:$0x1] %vm799, %v895
        %912 = vrot.lane.b32.xlu0 %v808, 64
        %v913 = vpop.permute.xlu0 %912
        %914 = vrot.lane.b32.xlu0 %v809, 64
        %v915 = vpop.permute.xlu0 %914
        %916 = vrot.lane.b32.xlu0 %v810, 64
        %v917 = vpop.permute.xlu0 %916
        %918 = vrot.lane.b32.xlu0 %v811, 64
        %v919 = vpop.permute.xlu0 %918
        %920 = vrot.lane.b32.xlu0 %v812, 64
        %v921 = vpop.permute.xlu0 %920
        %922 = vrot.lane.b32.xlu0 %v813, 64
        %v923 = vpop.permute.xlu0 %922
        %924 = vrot.lane.b32.xlu0 %v814, 64
        %v925 = vpop.permute.xlu0 %924
        %926 = vrot.lane.b32.xlu0 %v815, 64
        %v927 = vpop.permute.xlu0 %926
        %936 = vst.msk [vmem:[%s306 + $0x4] sm:$0x1] %vm799, %v913
        %937 = vst.msk [vmem:[%s306 + $0x14] sm:$0x1] %vm799, %v915
        %938 = vst.msk [vmem:[%s306 + $0x24] sm:$0x1] %vm799, %v917
        %939 = vst.msk [vmem:[%s306 + $0x34] sm:$0x1] %vm799, %v919
        %940 = vst.msk [vmem:[%s306 + $0x44] sm:$0x1] %vm799, %v921
        %941 = vst.msk [vmem:[%s306 + $0x54] sm:$0x1] %vm799, %v923
        %942 = vst.msk [vmem:[%s306 + $0x64] sm:$0x1] %vm799, %v925
        %943 = vst.msk [vmem:[%s306 + $0x74] sm:$0x1] %vm799, %v927
        %944 = vrot.lane.b32.xlu0 %v808, 48
        %v945 = vpop.permute.xlu0 %944
        %946 = vrot.lane.b32.xlu0 %v809, 48
        %v947 = vpop.permute.xlu0 %946
        %948 = vrot.lane.b32.xlu0 %v810, 48
        %v949 = vpop.permute.xlu0 %948
        %950 = vrot.lane.b32.xlu0 %v811, 48
        %v951 = vpop.permute.xlu0 %950
        %952 = vrot.lane.b32.xlu0 %v812, 48
        %v953 = vpop.permute.xlu0 %952
        %954 = vrot.lane.b32.xlu0 %v813, 48
        %v955 = vpop.permute.xlu0 %954
        %956 = vrot.lane.b32.xlu0 %v814, 48
        %v957 = vpop.permute.xlu0 %956
        %958 = vrot.lane.b32.xlu0 %v815, 48
        %v959 = vpop.permute.xlu0 %958
        %968 = vst.msk [vmem:[%s306 + $0x5] sm:$0x1] %vm799, %v945
        %969 = vst.msk [vmem:[%s306 + $0x15] sm:$0x1] %vm799, %v947
        %970 = vst.msk [vmem:[%s306 + $0x25] sm:$0x1] %vm799, %v949
        %971 = vst.msk [vmem:[%s306 + $0x35] sm:$0x1] %vm799, %v951
        %972 = vst.msk [vmem:[%s306 + $0x45] sm:$0x1] %vm799, %v953
        %973 = vst.msk [vmem:[%s306 + $0x55] sm:$0x1] %vm799, %v955
        %974 = vst.msk [vmem:[%s306 + $0x65] sm:$0x1] %vm799, %v957
        %975 = vst.msk [vmem:[%s306 + $0x75] sm:$0x1] %vm799, %v959
        %976 = vrot.lane.b32.xlu0 %v808, 32
        %v977 = vpop.permute.xlu0 %976
        %978 = vrot.lane.b32.xlu0 %v809, 32
        %v979 = vpop.permute.xlu0 %978
        %980 = vrot.lane.b32.xlu0 %v810, 32
        %v981 = vpop.permute.xlu0 %980
        %982 = vrot.lane.b32.xlu0 %v811, 32
        %v983 = vpop.permute.xlu0 %982
        %984 = vrot.lane.b32.xlu0 %v812, 32
        %v985 = vpop.permute.xlu0 %984
        %986 = vrot.lane.b32.xlu0 %v813, 32
        %v987 = vpop.permute.xlu0 %986
        %988 = vrot.lane.b32.xlu0 %v814, 32
        %v989 = vpop.permute.xlu0 %988
        %990 = vrot.lane.b32.xlu0 %v815, 32
        %v991 = vpop.permute.xlu0 %990
        %1000 = vst.msk [vmem:[%s306 + $0x6] sm:$0x1] %vm799, %v977
        %1001 = vst.msk [vmem:[%s306 + $0x16] sm:$0x1] %vm799, %v979
        %1002 = vst.msk [vmem:[%s306 + $0x26] sm:$0x1] %vm799, %v981
        %1003 = vst.msk [vmem:[%s306 + $0x36] sm:$0x1] %vm799, %v983
        %1004 = vst.msk [vmem:[%s306 + $0x46] sm:$0x1] %vm799, %v985
        %1005 = vst.msk [vmem:[%s306 + $0x56] sm:$0x1] %vm799, %v987
        %1006 = vst.msk [vmem:[%s306 + $0x66] sm:$0x1] %vm799, %v989
        %1007 = vst.msk [vmem:[%s306 + $0x76] sm:$0x1] %vm799, %v991
        %1008 = vrot.lane.b32.xlu0 %v808, 16
        %v1009 = vpop.permute.xlu0 %1008
        %1010 = vrot.lane.b32.xlu0 %v809, 16
        %v1011 = vpop.permute.xlu0 %1010
        %1012 = vrot.lane.b32.xlu0 %v810, 16
        %v1013 = vpop.permute.xlu0 %1012
        %1014 = vrot.lane.b32.xlu0 %v811, 16
        %v1015 = vpop.permute.xlu0 %1014
        %1016 = vrot.lane.b32.xlu0 %v812, 16
        %v1017 = vpop.permute.xlu0 %1016
        %1018 = vrot.lane.b32.xlu0 %v813, 16
        %v1019 = vpop.permute.xlu0 %1018
        %1020 = vrot.lane.b32.xlu0 %v814, 16
        %v1021 = vpop.permute.xlu0 %1020
        %1022 = vrot.lane.b32.xlu0 %v815, 16
        %v1023 = vpop.permute.xlu0 %1022
        %1032 = vst.msk [vmem:[%s306 + $0x7] sm:$0x1] %vm799, %v1009
        %1033 = vst.msk [vmem:[%s306 + $0x17] sm:$0x1] %vm799, %v1011
        %1034 = vst.msk [vmem:[%s306 + $0x27] sm:$0x1] %vm799, %v1013
        %1035 = vst.msk [vmem:[%s306 + $0x37] sm:$0x1] %vm799, %v1015
        %1036 = vst.msk [vmem:[%s306 + $0x47] sm:$0x1] %vm799, %v1017
        %1037 = vst.msk [vmem:[%s306 + $0x57] sm:$0x1] %vm799, %v1019
        %1038 = vst.msk [vmem:[%s306 + $0x67] sm:$0x1] %vm799, %v1021
        %1039 = vst.msk [vmem:[%s306 + $0x77] sm:$0x1] %vm799, %v1023
        %v1041 = vrot.slane %v783, 1
        %v1042 = vrot.slane %v783, 2
        %v1043 = vrot.slane %v783, 3
        %v1044 = vrot.slane %v783, 4
        %v1045 = vrot.slane %v783, 5
        %v1046 = vrot.slane %v783, 6
        %v1047 = vrot.slane %v783, 7
        %1055 = vst.msk [vmem:[%s306 + $0x8] sm:$0x1] %vm799, %v783
        %1056 = vst.msk [vmem:[%s306 + $0x18] sm:$0x1] %vm799, %v1041
        %1057 = vst.msk [vmem:[%s306 + $0x28] sm:$0x1] %vm799, %v1042
        %1058 = vst.msk [vmem:[%s306 + $0x38] sm:$0x1] %vm799, %v1043
        %1059 = vst.msk [vmem:[%s306 + $0x48] sm:$0x1] %vm799, %v1044
        %1060 = vst.msk [vmem:[%s306 + $0x58] sm:$0x1] %vm799, %v1045
        %1061 = vst.msk [vmem:[%s306 + $0x68] sm:$0x1] %vm799, %v1046
        %1062 = vst.msk [vmem:[%s306 + $0x78] sm:$0x1] %vm799, %v1047
        %v1063 = vperm.slane %v783, 0
        %v1064 = vperm.slane %v1041, 0
        %v1065 = vperm.slane %v1042, 0
        %v1066 = vperm.slane %v1043, 0
        %v1067 = vperm.slane %v1044, 0
        %v1068 = vperm.slane %v1045, 0
        %v1069 = vperm.slane %v1046, 0
        %v1070 = vperm.slane %v1047, 0
        %1071 = vrot.lane.b32.xlu0 %v1063, 112
        %v1072 = vpop.permute.xlu0 %1071
        %1073 = vrot.lane.b32.xlu0 %v1064, 112
        %v1074 = vpop.permute.xlu0 %1073
        %1075 = vrot.lane.b32.xlu0 %v1065, 112
        %v1076 = vpop.permute.xlu0 %1075
        %1077 = vrot.lane.b32.xlu0 %v1066, 112
        %v1078 = vpop.permute.xlu0 %1077
        %1079 = vrot.lane.b32.xlu0 %v1067, 112
        %v1080 = vpop.permute.xlu0 %1079
        %1081 = vrot.lane.b32.xlu0 %v1068, 112
        %v1082 = vpop.permute.xlu0 %1081
        %1083 = vrot.lane.b32.xlu0 %v1069, 112
        %v1084 = vpop.permute.xlu0 %1083
        %1085 = vrot.lane.b32.xlu0 %v1070, 112
        %v1086 = vpop.permute.xlu0 %1085
        %1095 = vst.msk [vmem:[%s306 + $0x9] sm:$0x1] %vm799, %v1072
        %1096 = vst.msk [vmem:[%s306 + $0x19] sm:$0x1] %vm799, %v1074
        %1097 = vst.msk [vmem:[%s306 + $0x29] sm:$0x1] %vm799, %v1076
        %1098 = vst.msk [vmem:[%s306 + $0x39] sm:$0x1] %vm799, %v1078
        %1099 = vst.msk [vmem:[%s306 + $0x49] sm:$0x1] %vm799, %v1080
        %1100 = vst.msk [vmem:[%s306 + $0x59] sm:$0x1] %vm799, %v1082
        %1101 = vst.msk [vmem:[%s306 + $0x69] sm:$0x1] %vm799, %v1084
        %1102 = vst.msk [vmem:[%s306 + $0x79] sm:$0x1] %vm799, %v1086
        %1103 = vrot.lane.b32.xlu0 %v1063, 96
        %v1104 = vpop.permute.xlu0 %1103
        %1105 = vrot.lane.b32.xlu0 %v1064, 96
        %v1106 = vpop.permute.xlu0 %1105
        %1107 = vrot.lane.b32.xlu0 %v1065, 96
        %v1108 = vpop.permute.xlu0 %1107
        %1109 = vrot.lane.b32.xlu0 %v1066, 96
        %v1110 = vpop.permute.xlu0 %1109
        %1111 = vrot.lane.b32.xlu0 %v1067, 96
        %v1112 = vpop.permute.xlu0 %1111
        %1113 = vrot.lane.b32.xlu0 %v1068, 96
        %v1114 = vpop.permute.xlu0 %1113
        %1115 = vrot.lane.b32.xlu0 %v1069, 96
        %v1116 = vpop.permute.xlu0 %1115
        %1117 = vrot.lane.b32.xlu0 %v1070, 96
        %v1118 = vpop.permute.xlu0 %1117
        %1127 = vst.msk [vmem:[%s306 + $0xa] sm:$0x1] %vm799, %v1104
        %1128 = vst.msk [vmem:[%s306 + $0x1a] sm:$0x1] %vm799, %v1106
        %1129 = vst.msk [vmem:[%s306 + $0x2a] sm:$0x1] %vm799, %v1108
        %1130 = vst.msk [vmem:[%s306 + $0x3a] sm:$0x1] %vm799, %v1110
        %1131 = vst.msk [vmem:[%s306 + $0x4a] sm:$0x1] %vm799, %v1112
        %1132 = vst.msk [vmem:[%s306 + $0x5a] sm:$0x1] %vm799, %v1114
        %1133 = vst.msk [vmem:[%s306 + $0x6a] sm:$0x1] %vm799, %v1116
        %1134 = vst.msk [vmem:[%s306 + $0x7a] sm:$0x1] %vm799, %v1118
        %1135 = vrot.lane.b32.xlu0 %v1063, 80
        %v1136 = vpop.permute.xlu0 %1135
        %1137 = vrot.lane.b32.xlu0 %v1064, 80
        %v1138 = vpop.permute.xlu0 %1137
        %1139 = vrot.lane.b32.xlu0 %v1065, 80
        %v1140 = vpop.permute.xlu0 %1139
        %1141 = vrot.lane.b32.xlu0 %v1066, 80
        %v1142 = vpop.permute.xlu0 %1141
        %1143 = vrot.lane.b32.xlu0 %v1067, 80
        %v1144 = vpop.permute.xlu0 %1143
        %1145 = vrot.lane.b32.xlu0 %v1068, 80
        %v1146 = vpop.permute.xlu0 %1145
        %1147 = vrot.lane.b32.xlu0 %v1069, 80
        %v1148 = vpop.permute.xlu0 %1147
        %1149 = vrot.lane.b32.xlu0 %v1070, 80
        %v1150 = vpop.permute.xlu0 %1149
        %1159 = vst.msk [vmem:[%s306 + $0xb] sm:$0x1] %vm799, %v1136
        %1160 = vst.msk [vmem:[%s306 + $0x1b] sm:$0x1] %vm799, %v1138
        %1161 = vst.msk [vmem:[%s306 + $0x2b] sm:$0x1] %vm799, %v1140
        %1162 = vst.msk [vmem:[%s306 + $0x3b] sm:$0x1] %vm799, %v1142
        %1163 = vst.msk [vmem:[%s306 + $0x4b] sm:$0x1] %vm799, %v1144
        %1164 = vst.msk [vmem:[%s306 + $0x5b] sm:$0x1] %vm799, %v1146
        %1165 = vst.msk [vmem:[%s306 + $0x6b] sm:$0x1] %vm799, %v1148
        %1166 = vst.msk [vmem:[%s306 + $0x7b] sm:$0x1] %vm799, %v1150
        %1167 = vrot.lane.b32.xlu0 %v1063, 64
        %v1168 = vpop.permute.xlu0 %1167
        %1169 = vrot.lane.b32.xlu0 %v1064, 64
        %v1170 = vpop.permute.xlu0 %1169
        %1171 = vrot.lane.b32.xlu0 %v1065, 64
        %v1172 = vpop.permute.xlu0 %1171
        %1173 = vrot.lane.b32.xlu0 %v1066, 64
        %v1174 = vpop.permute.xlu0 %1173
        %1175 = vrot.lane.b32.xlu0 %v1067, 64
        %v1176 = vpop.permute.xlu0 %1175
        %1177 = vrot.lane.b32.xlu0 %v1068, 64
        %v1178 = vpop.permute.xlu0 %1177
        %1179 = vrot.lane.b32.xlu0 %v1069, 64
        %v1180 = vpop.permute.xlu0 %1179
        %1181 = vrot.lane.b32.xlu0 %v1070, 64
        %v1182 = vpop.permute.xlu0 %1181
        %1191 = vst.msk [vmem:[%s306 + $0xc] sm:$0x1] %vm799, %v1168
        %1192 = vst.msk [vmem:[%s306 + $0x1c] sm:$0x1] %vm799, %v1170
        %1193 = vst.msk [vmem:[%s306 + $0x2c] sm:$0x1] %vm799, %v1172
        %1194 = vst.msk [vmem:[%s306 + $0x3c] sm:$0x1] %vm799, %v1174
        %1195 = vst.msk [vmem:[%s306 + $0x4c] sm:$0x1] %vm799, %v1176
        %1196 = vst.msk [vmem:[%s306 + $0x5c] sm:$0x1] %vm799, %v1178
        %1197 = vst.msk [vmem:[%s306 + $0x6c] sm:$0x1] %vm799, %v1180
        %1198 = vst.msk [vmem:[%s306 + $0x7c] sm:$0x1] %vm799, %v1182
        %1199 = vrot.lane.b32.xlu0 %v1063, 48
        %v1200 = vpop.permute.xlu0 %1199
        %1201 = vrot.lane.b32.xlu0 %v1064, 48
        %v1202 = vpop.permute.xlu0 %1201
        %1203 = vrot.lane.b32.xlu0 %v1065, 48
        %v1204 = vpop.permute.xlu0 %1203
        %1205 = vrot.lane.b32.xlu0 %v1066, 48
        %v1206 = vpop.permute.xlu0 %1205
        %1207 = vrot.lane.b32.xlu0 %v1067, 48
        %v1208 = vpop.permute.xlu0 %1207
        %1209 = vrot.lane.b32.xlu0 %v1068, 48
        %v1210 = vpop.permute.xlu0 %1209
        %1211 = vrot.lane.b32.xlu0 %v1069, 48
        %v1212 = vpop.permute.xlu0 %1211
        %1213 = vrot.lane.b32.xlu0 %v1070, 48
        %v1214 = vpop.permute.xlu0 %1213
        %1223 = vst.msk [vmem:[%s306 + $0xd] sm:$0x1] %vm799, %v1200
        %1224 = vst.msk [vmem:[%s306 + $0x1d] sm:$0x1] %vm799, %v1202
        %1225 = vst.msk [vmem:[%s306 + $0x2d] sm:$0x1] %vm799, %v1204
        %1226 = vst.msk [vmem:[%s306 + $0x3d] sm:$0x1] %vm799, %v1206
        %1227 = vst.msk [vmem:[%s306 + $0x4d] sm:$0x1] %vm799, %v1208
        %1228 = vst.msk [vmem:[%s306 + $0x5d] sm:$0x1] %vm799, %v1210
        %1229 = vst.msk [vmem:[%s306 + $0x6d] sm:$0x1] %vm799, %v1212
        %1230 = vst.msk [vmem:[%s306 + $0x7d] sm:$0x1] %vm799, %v1214
        %s1231 = smul.u32 8, %s19
        %p1232 = scmp.lt.s32.totalorder %s18, 1
        %s1233 = scalar_select %p1232, %s18, 1
        %p1234 = scmp.lt.s32.totalorder %s1231, 31
        %s1235 = scalar_select %p1234, %s1231, 31
        %s1236 = smul.addr %s1235, 2
        %s1237 = smul.addr %s1233, 64
        %s1238 = sadd.s32 %s1236, %s1237
        %s1239 = smul.addr %s1238, 8
        %s1240 = scalar_lea.vmem %s3, %s1239
        // Predicated region
        $region74: #{tpu_custom_call.1} parent=68 // pred_check
          %p1241 = pneg %p124
        $region75: #{tpu_custom_call.1} parent=68 // pred_check_branch
          %1243 = sbr.rel (%p1241) target = $region77
        $region76: #{tpu_custom_call.1} parent=68 // pred_region
          %s1244 = smul.u32 8, %s19
        $region77: #{tpu_custom_call.1} parent=68 // pred_fallthru
          _
      $region69: #{tpu_custom_call.1} parent=5 // pred_fallthru
        _
      %p1245 = scmp.le.s32.totalorder 2, %s9
      // Predicated region
      $region78: #{tpu_custom_call.1} parent=5 // pred_check
        %p1246 = pneg %p1245
      $region79: #{tpu_custom_call.1} parent=5 // pred_check_branch
        %1248 = sbr.rel (%p1246) target = $region81
      $region80: #{tpu_custom_call.1} parent=5 // pred_region
        %s1249 = ssub.s32 %s9, 2
        // Predicated region
        $region82: #{tpu_custom_call.1} parent=80 // pred_check
          %p1250 = pneg %p130
        $region83: #{tpu_custom_call.1} parent=80 // pred_check_branch
          %1252 = sbr.rel (%p1250) target = $region85
        $region84: #{tpu_custom_call.1} parent=80 // pred_region
          %s1253 = smul.u32 8, %s21
          %p1254 = scmp.lt.s32.totalorder %s20, 1
          %s1255 = scalar_select %p1254, %s20, 1
          %p1256 = scmp.lt.s32.totalorder %s1253, 31
          %s1257 = scalar_select %p1256, %s1253, 31
          %s1258 = smul.addr %s1257, 2
          %s1259 = smul.addr %s1255, 64
          %s1260 = sadd.s32 %s1258, %s1259
          %s1261 = smul.addr %s1260, 8
          %s1262 = scalar_lea.vmem %s3, %s1261
        $region85: #{tpu_custom_call.1} parent=80 // pred_fallthru
          _
      $region81: #{tpu_custom_call.1} parent=5 // pred_fallthru
        _
    $region6: #{tpu_custom_call.1} parent=1 // loop_footer
      %s13 = sadd.s32 1, %s9
    $region7: #{tpu_custom_call.1} parent=1 // loop_footer_branch
      %8 = sbr.rel target = $region3
    $region8: #{tpu_custom_call.1} parent=1 // loop_exit
      _

</llo_original>
